<compile_context>
chip_gen: v6e
topology: v6e:2x2x1
jax: 0.10.0
libtpu: 0.0.40
codegen_flags: <defaults>
</compile_context>

<pallas_src>
import functools

import jax
import jax.numpy as jnp
from jax.experimental import pallas as pl
from jax.experimental.pallas import tpu as pltpu


# ------------------------------ fused kernel -------------------------------- #

def _fused_forward_kernel(att_ref, x_ref, q_ref,
                          aw_ref, ab_ref, cw_ref, cb_ref,
                          iw_ref, ib_ref, qw_ref, qb_ref,
                          pwa_ref, pwi_ref, pwq_ref, pb_ref,
                          conv_ref, pred_ref,
                          *, n_b, n_hw, c_out):
    f32 = jnp.float32

    # ---- im_feat_in: 1x1 conv, lane-dense (Cout on lanes), whole batch at once.
    # x rows are ordered (hw, b): row m = hw * n_b + b.
    conv = jnp.dot(x_ref[...], cw_ref[...], preferred_element_type=f32) + cb_ref[...]
    conv_ref[...] = conv                       # (HW*B, Cout)

    # ---- atten_input: Linear + LeakyReLU(0.1)
    att = jnp.dot(att_ref[...], aw_ref[...], preferred_element_type=f32) + ab_ref[...]
    att = jnp.where(att >= 0.0, att, 0.1 * att)

    # ---- question_feat_in: Linear + LeakyReLU(0.1)
    qf = jnp.dot(q_ref[...], qw_ref[...], preferred_element_type=f32) + qb_ref[...]
    qf = jnp.where(qf >= 0.0, qf, 0.1 * qf)

    # ---- im_feat_linear: Linear + LeakyReLU(default 0.01)
    # Computed as an accumulation over spatial positions (avoids in-kernel
    # reshape).  iw rows are in (hw, c) order to match the conv row layout;
    # this is exactly PyTorch's channel-major flatten after the column
    # permutation applied in prepare_params().
    iw = iw_ref[...]                           # (HW*Cout, hidden)
    hidden = iw.shape[-1]
    imf = jnp.zeros((n_b, hidden), f32)
    for hw in range(n_hw):                     # static unrolled loop (HW small)
        imf = imf + jnp.dot(conv[hw * n_b:(hw + 1) * n_b, :],
                            iw[hw * c_out:(hw + 1) * c_out, :],
                            preferred_element_type=f32)
    imf = imf + ib_ref[...]
    imf = jnp.where(imf >= 0.0, imf, 0.01 * imf)

    # ---- corr_pred_layer: concat fused into three partial dots + sigmoid
    logit = (jnp.dot(att, pwa_ref[...], preferred_element_type=f32)
             + jnp.dot(imf, pwi_ref[...], preferred_element_type=f32)
             + jnp.dot(qf, pwq_ref[...], preferred_element_type=f32)
             + pb_ref[...])
    pred_ref[...] = jax.nn.sigmoid(logit)


def _full_spec(shape):
    nd = len(shape)
    return pl.BlockSpec(tuple(shape), lambda *_: (0,) * nd)


# ------------------------- parameter initialization ------------------------- #

def _init_linear(key, out_f, in_f):
    # Mirrors PyTorch default Linear/Conv init: U(-1/sqrt(fan_in), 1/sqrt(fan_in))
    kw, kb = jax.random.split(key)
    bound = 1.0 / (in_f ** 0.5)
    w = jax.random.uniform(kw, (out_f, in_f), jnp.float32, -bound, bound)
    b = jax.random.uniform(kb, (out_f,), jnp.float32, -bound, bound)
    return w, b


def init_params(key, atten_dim, hidden, q_dim, im_h, im_w, im_c, conv_out):
    """PyTorch-convention parameters (used by the pure-JAX reference)."""
    ks = jax.random.split(key, 5)
    p = {}
    p["atten_w"], p["atten_b"] = _init_linear(ks[0], hidden, atten_dim)
    p["conv_w"], p["conv_b"] = _init_linear(ks[1], conv_out, im_c)          # 1x1 conv
    p["imlin_w"], p["imlin_b"] = _init_linear(ks[2], hidden, im_h * im_w * conv_out)
    p["q_w"], p["q_b"] = _init_linear(ks[3], hidden, q_dim)
    p["pred_w"], p["pred_b"] = _init_linear(ks[4], 1, hidden * 3)
    return p


def prepare_params(p):
    """One-time re-layout of the PyTorch-convention params into kernel layout.

    Done once outside the forward, so no per-call weight transposes remain.
    """
    hidden = p["imlin_w"].shape[0]
    cout = p["conv_w"].shape[0]
    hw = p["imlin_w"].shape[1] // cout
    # imlin_w[o, c*HW + hw]  ->  iw[hw*Cout + c, o]
    iw = (p["imlin_w"].reshape(hidden, cout, hw)
          .transpose(2, 1, 0)
          .reshape(hw * cout, hidden))
    return {
        "aw": p["atten_w"].T,                       # (A, hidden)
        "ab": p["atten_b"].reshape(1, -1),
        "cw": p["conv_w"].T,                        # (Cin, Cout)
        "cb": p["conv_b"].reshape(1, -1),
        "iw": iw,                                   # (HW*Cout, hidden), (hw, c) rows
        "ib": p["imlin_b"].reshape(1, -1),
        "qw": p["q_w"].T,                           # (Q, hidden)
        "qb": p["q_b"].reshape(1, -1),
        "pwa": p["pred_w"][:, 0:hidden].T,          # (hidden, 1)
        "pwi": p["pred_w"][:, hidden:2 * hidden].T,
        "pwq": p["pred_w"][:, 2 * hidden:3 * hidden].T,
        "pb": p["pred_b"].reshape(1, 1),
    }


# ---------------------------------- forward ---------------------------------- #

@jax.jit
def forward(kparams, attention, im_feat, q_feat):
    B, Cin, H, W = im_feat.shape
    HW = H * W
    Cout = kparams["cw"].shape[1]

    # NCHW -> (H, W, B, Cin) -> (HW*B, Cin): lane-dense Cin for the conv matmul.
    x = jnp.transpose(im_feat, (2, 3, 0, 1)).reshape(HW * B, Cin)

    operands = (attention, x, q_feat,
                kparams["aw"], kparams["ab"], kparams["cw"], kparams["cb"],
                kparams["iw"], kparams["ib"], kparams["qw"], kparams["qb"],
                kparams["pwa"], kparams["pwi"], kparams["pwq"], kparams["pb"])

    conv_hwbc, pred = pl.pallas_call(
        functools.partial(_fused_forward_kernel, n_b=B, n_hw=HW, c_out=Cout),
        out_shape=(jax.ShapeDtypeStruct((HW * B, Cout), jnp.float32),
                   jax.ShapeDtypeStruct((B, 1), jnp.float32)),
        grid=(1,),
        in_specs=[_full_spec(op.shape) for op in operands],
        out_specs=(_full_spec((HW * B, Cout)), _full_spec((B, 1))),
        compiler_params=pltpu.CompilerParams(dimension_semantics=("arbitrary",)),
    )(*operands)

    # TODO(synk): register_hook/save_gradients is backward-pass bookkeeping; no forward effect.
    # Recover the PyTorch NCHW im_feature layout (tiny transpose, fused by XLA).
    im_feature = jnp.transpose(conv_hwbc.reshape(H, W, B, Cout), (2, 3, 0, 1))
    return {"wrong_pred": pred, "im_feature": [im_feature]}


# ---------------------------- plain-JAX reference ----------------------------- #

def forward_ref(params, attention, im_feat, q_feat):
    def lrelu(x, s):
        return jnp.where(x >= 0, x, s * x)
    att = lrelu(attention @ params["atten_w"].T + params["atten_b"], 0.1)
    B, Cin, H, W = im_feat.shape
    conv = jnp.einsum("oc,bchw->bohw", params["conv_w"], im_feat) \
        + params["conv_b"][None, :, None, None]
    imf = lrelu(conv.reshape(B, -1) @ params["imlin_w"].T + params["imlin_b"], 0.01)
    qf = lrelu(q_feat @ params["q_w"].T + params["q_b"], 0.1)
    cat = jnp.concatenate([att, imf, qf], axis=1)
    pred = jax.nn.sigmoid(cat @ params["pred_w"].T + params["pred_b"])
    return {"wrong_pred": pred, "im_feature": [conv]}


# ------------------------------------ main ------------------------------------ #

if __name__ == "__main__":
    # Small shapes consistent with the module's forward:
    #   attention: (B, atten_dim), im_feat: (B, Cin, H, W) NCHW, q_feat: (B, q_feat_dim)
    B = 2
    ATTEN_DIM = 256
    HIDDEN = 32
    Q_DIM = 64
    IM_H, IM_W, IM_C = 4, 4, 128   # im_feat_dim = (H, W, C) as in module signature
    CONV_OUT = 64                  # scaled-down stand-in for the module's 1024

    key = jax.random.PRNGKey(0)
    k_param, k_att, k_im, k_q = jax.random.split(key, 4)

    params = init_params(k_param, ATTEN_DIM, HIDDEN, Q_DIM, IM_H, IM_W, IM_C, CONV_OUT)
    kparams = prepare_params(params)   # one-time kernel-layout weights

    attention = jax.random.normal(k_att, (B, ATTEN_DIM), jnp.float32)
    im_feat = jax.random.normal(k_im, (B, IM_C, IM_H, IM_W), jnp.float32)
    q_feat = jax.random.normal(k_q, (B, Q_DIM), jnp.float32)

    out = forward(kparams, attention, im_feat, q_feat)
    jax.block_until_ready(out["wrong_pred"])
    jax.block_until_ready(out["im_feature"][0])

    ref = forward_ref(params, attention, im_feat, q_feat)
    assert out["wrong_pred"].shape == (B, 1)
    assert out["im_feature"][0].shape == (B, CONV_OUT, IM_H, IM_W)
    assert jnp.allclose(out["wrong_pred"], ref["wrong_pred"], atol=1e-5, rtol=1e-5)
    assert jnp.allclose(out["im_feature"][0], ref["im_feature"][0], atol=1e-4, rtol=1e-4)

    print("KERNEL_OK")
</pallas_src>

<mosaic_0001>
module attributes {stable_mosaic.version = 11 : i64} {
  func.func @_fused_forward_kernel(%arg0: i32, %arg1: memref<2x256xf32, #tpu.memory_space<vmem>>, %arg2: memref<32x128xf32, #tpu.memory_space<vmem>>, %arg3: memref<2x64xf32, #tpu.memory_space<vmem>>, %arg4: memref<256x32xf32, #tpu.memory_space<vmem>>, %arg5: memref<1x32xf32, #tpu.memory_space<vmem>>, %arg6: memref<128x64xf32, #tpu.memory_space<vmem>>, %arg7: memref<1x64xf32, #tpu.memory_space<vmem>>, %arg8: memref<1024x32xf32, #tpu.memory_space<vmem>>, %arg9: memref<1x32xf32, #tpu.memory_space<vmem>>, %arg10: memref<64x32xf32, #tpu.memory_space<vmem>>, %arg11: memref<1x32xf32, #tpu.memory_space<vmem>>, %arg12: memref<32x1xf32, #tpu.memory_space<vmem>>, %arg13: memref<32x1xf32, #tpu.memory_space<vmem>>, %arg14: memref<32x1xf32, #tpu.memory_space<vmem>>, %arg15: memref<1x1xf32, #tpu.memory_space<vmem>>, %arg16: memref<32x64xf32, #tpu.memory_space<vmem>>, %arg17: memref<2x1xf32, #tpu.memory_space<vmem>>) attributes {dimension_semantics = [#tpu.dimension_semantics<arbitrary>], iteration_bounds = array<i64: 1>, scalar_prefetch = 0 : i64, scratch_operands = 0 : i64, tpu.core_type = #tpu.core_type<tc>, window_params = [{pipeline_mode = #tpu.pipeline_mode<synchronous>, transform_indices = @transform_0, window_bounds = array<i64: 2, 256>}, {pipeline_mode = #tpu.pipeline_mode<synchronous>, transform_indices = @transform_1, window_bounds = array<i64: 32, 128>}, {pipeline_mode = #tpu.pipeline_mode<synchronous>, transform_indices = @transform_2, window_bounds = array<i64: 2, 64>}, {pipeline_mode = #tpu.pipeline_mode<synchronous>, transform_indices = @transform_3, window_bounds = array<i64: 256, 32>}, {pipeline_mode = #tpu.pipeline_mode<synchronous>, transform_indices = @transform_4, window_bounds = array<i64: 1, 32>}, {pipeline_mode = #tpu.pipeline_mode<synchronous>, transform_indices = @transform_5, window_bounds = array<i64: 128, 64>}, {pipeline_mode = #tpu.pipeline_mode<synchronous>, transform_indices = @transform_6, window_bounds = array<i64: 1, 64>}, {pipeline_mode = #tpu.pipeline_mode<synchronous>, transform_indices = @transform_7, window_bounds = array<i64: 1024, 32>}, {pipeline_mode = #tpu.pipeline_mode<synchronous>, transform_indices = @transform_8, window_bounds = array<i64: 1, 32>}, {pipeline_mode = #tpu.pipeline_mode<synchronous>, transform_indices = @transform_9, window_bounds = array<i64: 64, 32>}, {pipeline_mode = #tpu.pipeline_mode<synchronous>, transform_indices = @transform_10, window_bounds = array<i64: 1, 32>}, {pipeline_mode = #tpu.pipeline_mode<synchronous>, transform_indices = @transform_11, window_bounds = array<i64: 32, 1>}, {pipeline_mode = #tpu.pipeline_mode<synchronous>, transform_indices = @transform_12, window_bounds = array<i64: 32, 1>}, {pipeline_mode = #tpu.pipeline_mode<synchronous>, transform_indices = @transform_13, window_bounds = array<i64: 32, 1>}, {pipeline_mode = #tpu.pipeline_mode<synchronous>, transform_indices = @transform_14, window_bounds = array<i64: 1, 1>}, {pipeline_mode = #tpu.pipeline_mode<synchronous>, transform_indices = @transform_15, window_bounds = array<i64: 32, 64>}, {pipeline_mode = #tpu.pipeline_mode<synchronous>, transform_indices = @transform_16, window_bounds = array<i64: 2, 1>}]} {
    %c0 = arith.constant 0 : index
    %c0_0 = arith.constant 0 : index
    %0 = vector.load %arg2[%c0, %c0_0] : memref<32x128xf32, #tpu.memory_space<vmem>>, vector<32x128xf32>
    %c0_1 = arith.constant 0 : index
    %c0_2 = arith.constant 0 : index
    %1 = vector.load %arg6[%c0_1, %c0_2] : memref<128x64xf32, #tpu.memory_space<vmem>>, vector<128x64xf32>
    %cst = arith.constant dense<0.000000e+00> : vector<32x64xf32>
    %2 = tpu.matmul %0, %1, %cst {dimension_numbers = #tpu.dot_dimension_numbers<[1], [0], [0], [1], [0, 0, 1, 1], [], []>} : vector<32x128xf32>, vector<128x64xf32>, vector<32x64xf32> -> vector<32x64xf32>
    %c0_3 = arith.constant 0 : index
    %c0_4 = arith.constant 0 : index
    %3 = vector.load %arg7[%c0_3, %c0_4] : memref<1x64xf32, #tpu.memory_space<vmem>>, vector<1x64xf32>
    %4 = vector.broadcast %3 : vector<1x64xf32> to vector<32x64xf32>
    %5 = arith.addf %2, %4 : vector<32x64xf32>
    %c0_5 = arith.constant 0 : index
    %c0_6 = arith.constant 0 : index
    %6 = vector.load %arg16[%c0_5, %c0_6] : memref<32x64xf32, #tpu.memory_space<vmem>>, vector<32x64xf32>
    tpu.vector_store %arg16[%c0_5, %c0_6], %5 {strides = array<i32>} : memref<32x64xf32, #tpu.memory_space<vmem>>, vector<32x64xf32>,
    %c0_7 = arith.constant 0 : index
    %c0_8 = arith.constant 0 : index
    %7 = vector.load %arg1[%c0_7, %c0_8] : memref<2x256xf32, #tpu.memory_space<vmem>>, vector<2x256xf32>
    %c0_9 = arith.constant 0 : index
    %c0_10 = arith.constant 0 : index
    %8 = vector.load %arg4[%c0_9, %c0_10] : memref<256x32xf32, #tpu.memory_space<vmem>>, vector<256x32xf32>
    %cst_11 = arith.constant dense<0.000000e+00> : vector<2x32xf32>
    %9 = tpu.matmul %7, %8, %cst_11 {dimension_numbers = #tpu.dot_dimension_numbers<[1], [0], [0], [1], [0, 0, 1, 1], [], []>} : vector<2x256xf32>, vector<256x32xf32>, vector<2x32xf32> -> vector<2x32xf32>
    %c0_12 = arith.constant 0 : index
    %c0_13 = arith.constant 0 : index
    %10 = vector.load %arg5[%c0_12, %c0_13] : memref<1x32xf32, #tpu.memory_space<vmem>>, vector<1x32xf32>
    %11 = vector.broadcast %10 : vector<1x32xf32> to vector<2x32xf32>
    %12 = arith.addf %9, %11 : vector<2x32xf32>
    %cst_14 = arith.constant 0.000000e+00 : f32
    %13 = vector.broadcast %cst_14 : f32 to vector<2x32xf32>
    %14 = arith.cmpf oge, %12, %13 : vector<2x32xf32>
    %cst_15 = arith.constant 1.000000e-01 : f32
    %15 = vector.broadcast %cst_15 : f32 to vector<2x32xf32>
    %16 = arith.mulf %15, %12 : vector<2x32xf32>
    %17 = arith.select %14, %12, %16 : vector<2x32xi1>, vector<2x32xf32>
    %c0_16 = arith.constant 0 : index
    %c0_17 = arith.constant 0 : index
    %18 = vector.load %arg3[%c0_16, %c0_17] : memref<2x64xf32, #tpu.memory_space<vmem>>, vector<2x64xf32>
    %c0_18 = arith.constant 0 : index
    %c0_19 = arith.constant 0 : index
    %19 = vector.load %arg10[%c0_18, %c0_19] : memref<64x32xf32, #tpu.memory_space<vmem>>, vector<64x32xf32>
    %cst_20 = arith.constant dense<0.000000e+00> : vector<2x32xf32>
    %20 = tpu.matmul %18, %19, %cst_20 {dimension_numbers = #tpu.dot_dimension_numbers<[1], [0], [0], [1], [0, 0, 1, 1], [], []>} : vector<2x64xf32>, vector<64x32xf32>, vector<2x32xf32> -> vector<2x32xf32>
    %c0_21 = arith.constant 0 : index
    %c0_22 = arith.constant 0 : index
    %21 = vector.load %arg11[%c0_21, %c0_22] : memref<1x32xf32, #tpu.memory_space<vmem>>, vector<1x32xf32>
    %22 = vector.broadcast %21 : vector<1x32xf32> to vector<2x32xf32>
    %23 = arith.addf %20, %22 : vector<2x32xf32>
    %cst_23 = arith.constant 0.000000e+00 : f32
    %24 = vector.broadcast %cst_23 : f32 to vector<2x32xf32>
    %25 = arith.cmpf oge, %23, %24 : vector<2x32xf32>
    %cst_24 = arith.constant 1.000000e-01 : f32
    %26 = vector.broadcast %cst_24 : f32 to vector<2x32xf32>
    %27 = arith.mulf %26, %23 : vector<2x32xf32>
    %28 = arith.select %25, %23, %27 : vector<2x32xi1>, vector<2x32xf32>
    %c0_25 = arith.constant 0 : index
    %c0_26 = arith.constant 0 : index
    %29 = vector.load %arg8[%c0_25, %c0_26] : memref<1024x32xf32, #tpu.memory_space<vmem>>, vector<1024x32xf32>
    %cst_27 = arith.constant 0.000000e+00 : f32
    %30 = vector.broadcast %cst_27 : f32 to vector<2x32xf32>
    %31 = vector.extract_strided_slice %5 {offsets = [0, 0], sizes = [2, 64], strides = [1, 1]} : vector<32x64xf32> to vector<2x64xf32>
    %32 = vector.extract_strided_slice %29 {offsets = [0, 0], sizes = [64, 32], strides = [1, 1]} : vector<1024x32xf32> to vector<64x32xf32>
    %cst_28 = arith.constant dense<0.000000e+00> : vector<2x32xf32>
    %33 = tpu.matmul %31, %32, %cst_28 {dimension_numbers = #tpu.dot_dimension_numbers<[1], [0], [0], [1], [0, 0, 1, 1], [], []>} : vector<2x64xf32>, vector<64x32xf32>, vector<2x32xf32> -> vector<2x32xf32>
    %34 = arith.addf %30, %33 : vector<2x32xf32>
    %35 = vector.extract_strided_slice %5 {offsets = [2, 0], sizes = [2, 64], strides = [1, 1]} : vector<32x64xf32> to vector<2x64xf32>
    %36 = vector.extract_strided_slice %29 {offsets = [64, 0], sizes = [64, 32], strides = [1, 1]} : vector<1024x32xf32> to vector<64x32xf32>
    %cst_29 = arith.constant dense<0.000000e+00> : vector<2x32xf32>
    %37 = tpu.matmul %35, %36, %cst_29 {dimension_numbers = #tpu.dot_dimension_numbers<[1], [0], [0], [1], [0, 0, 1, 1], [], []>} : vector<2x64xf32>, vector<64x32xf32>, vector<2x32xf32> -> vector<2x32xf32>
    %38 = arith.addf %34, %37 : vector<2x32xf32>
    %39 = vector.extract_strided_slice %5 {offsets = [4, 0], sizes = [2, 64], strides = [1, 1]} : vector<32x64xf32> to vector<2x64xf32>
    %40 = vector.extract_strided_slice %29 {offsets = [128, 0], sizes = [64, 32], strides = [1, 1]} : vector<1024x32xf32> to vector<64x32xf32>
    %cst_30 = arith.constant dense<0.000000e+00> : vector<2x32xf32>
    %41 = tpu.matmul %39, %40, %cst_30 {dimension_numbers = #tpu.dot_dimension_numbers<[1], [0], [0], [1], [0, 0, 1, 1], [], []>} : vector<2x64xf32>, vector<64x32xf32>, vector<2x32xf32> -> vector<2x32xf32>
    %42 = arith.addf %38, %41 : vector<2x32xf32>
    %43 = vector.extract_strided_slice %5 {offsets = [6, 0], sizes = [2, 64], strides = [1, 1]} : vector<32x64xf32> to vector<2x64xf32>
    %44 = vector.extract_strided_slice %29 {offsets = [192, 0], sizes = [64, 32], strides = [1, 1]} : vector<1024x32xf32> to vector<64x32xf32>
    %cst_31 = arith.constant dense<0.000000e+00> : vector<2x32xf32>
    %45 = tpu.matmul %43, %44, %cst_31 {dimension_numbers = #tpu.dot_dimension_numbers<[1], [0], [0], [1], [0, 0, 1, 1], [], []>} : vector<2x64xf32>, vector<64x32xf32>, vector<2x32xf32> -> vector<2x32xf32>
    %46 = arith.addf %42, %45 : vector<2x32xf32>
    %47 = vector.extract_strided_slice %5 {offsets = [8, 0], sizes = [2, 64], strides = [1, 1]} : vector<32x64xf32> to vector<2x64xf32>
    %48 = vector.extract_strided_slice %29 {offsets = [256, 0], sizes = [64, 32], strides = [1, 1]} : vector<1024x32xf32> to vector<64x32xf32>
    %cst_32 = arith.constant dense<0.000000e+00> : vector<2x32xf32>
    %49 = tpu.matmul %47, %48, %cst_32 {dimension_numbers = #tpu.dot_dimension_numbers<[1], [0], [0], [1], [0, 0, 1, 1], [], []>} : vector<2x64xf32>, vector<64x32xf32>, vector<2x32xf32> -> vector<2x32xf32>
    %50 = arith.addf %46, %49 : vector<2x32xf32>
    %51 = vector.extract_strided_slice %5 {offsets = [10, 0], sizes = [2, 64], strides = [1, 1]} : vector<32x64xf32> to vector<2x64xf32>
    %52 = vector.extract_strided_slice %29 {offsets = [320, 0], sizes = [64, 32], strides = [1, 1]} : vector<1024x32xf32> to vector<64x32xf32>
    %cst_33 = arith.constant dense<0.000000e+00> : vector<2x32xf32>
    %53 = tpu.matmul %51, %52, %cst_33 {dimension_numbers = #tpu.dot_dimension_numbers<[1], [0], [0], [1], [0, 0, 1, 1], [], []>} : vector<2x64xf32>, vector<64x32xf32>, vector<2x32xf32> -> vector<2x32xf32>
    %54 = arith.addf %50, %53 : vector<2x32xf32>
    %55 = vector.extract_strided_slice %5 {offsets = [12, 0], sizes = [2, 64], strides = [1, 1]} : vector<32x64xf32> to vector<2x64xf32>
    %56 = vector.extract_strided_slice %29 {offsets = [384, 0], sizes = [64, 32], strides = [1, 1]} : vector<1024x32xf32> to vector<64x32xf32>
    %cst_34 = arith.constant dense<0.000000e+00> : vector<2x32xf32>
    %57 = tpu.matmul %55, %56, %cst_34 {dimension_numbers = #tpu.dot_dimension_numbers<[1], [0], [0], [1], [0, 0, 1, 1], [], []>} : vector<2x64xf32>, vector<64x32xf32>, vector<2x32xf32> -> vector<2x32xf32>
    %58 = arith.addf %54, %57 : vector<2x32xf32>
    %59 = vector.extract_strided_slice %5 {offsets = [14, 0], sizes = [2, 64], strides = [1, 1]} : vector<32x64xf32> to vector<2x64xf32>
    %60 = vector.extract_strided_slice %29 {offsets = [448, 0], sizes = [64, 32], strides = [1, 1]} : vector<1024x32xf32> to vector<64x32xf32>
    %cst_35 = arith.constant dense<0.000000e+00> : vector<2x32xf32>
    %61 = tpu.matmul %59, %60, %cst_35 {dimension_numbers = #tpu.dot_dimension_numbers<[1], [0], [0], [1], [0, 0, 1, 1], [], []>} : vector<2x64xf32>, vector<64x32xf32>, vector<2x32xf32> -> vector<2x32xf32>
    %62 = arith.addf %58, %61 : vector<2x32xf32>
    %63 = vector.extract_strided_slice %5 {offsets = [16, 0], sizes = [2, 64], strides = [1, 1]} : vector<32x64xf32> to vector<2x64xf32>
    %64 = vector.extract_strided_slice %29 {offsets = [512, 0], sizes = [64, 32], strides = [1, 1]} : vector<1024x32xf32> to vector<64x32xf32>
    %cst_36 = arith.constant dense<0.000000e+00> : vector<2x32xf32>
    %65 = tpu.matmul %63, %64, %cst_36 {dimension_numbers = #tpu.dot_dimension_numbers<[1], [0], [0], [1], [0, 0, 1, 1], [], []>} : vector<2x64xf32>, vector<64x32xf32>, vector<2x32xf32> -> vector<2x32xf32>
    %66 = arith.addf %62, %65 : vector<2x32xf32>
    %67 = vector.extract_strided_slice %5 {offsets = [18, 0], sizes = [2, 64], strides = [1, 1]} : vector<32x64xf32> to vector<2x64xf32>
    %68 = vector.extract_strided_slice %29 {offsets = [576, 0], sizes = [64, 32], strides = [1, 1]} : vector<1024x32xf32> to vector<64x32xf32>
    %cst_37 = arith.constant dense<0.000000e+00> : vector<2x32xf32>
    %69 = tpu.matmul %67, %68, %cst_37 {dimension_numbers = #tpu.dot_dimension_numbers<[1], [0], [0], [1], [0, 0, 1, 1], [], []>} : vector<2x64xf32>, vector<64x32xf32>, vector<2x32xf32> -> vector<2x32xf32>
    %70 = arith.addf %66, %69 : vector<2x32xf32>
    %71 = vector.extract_strided_slice %5 {offsets = [20, 0], sizes = [2, 64], strides = [1, 1]} : vector<32x64xf32> to vector<2x64xf32>
    %72 = vector.extract_strided_slice %29 {offsets = [640, 0], sizes = [64, 32], strides = [1, 1]} : vector<1024x32xf32> to vector<64x32xf32>
    %cst_38 = arith.constant dense<0.000000e+00> : vector<2x32xf32>
    %73 = tpu.matmul %71, %72, %cst_38 {dimension_numbers = #tpu.dot_dimension_numbers<[1], [0], [0], [1], [0, 0, 1, 1], [], []>} : vector<2x64xf32>, vector<64x32xf32>, vector<2x32xf32> -> vector<2x32xf32>
    %74 = arith.addf %70, %73 : vector<2x32xf32>
    %75 = vector.extract_strided_slice %5 {offsets = [22, 0], sizes = [2, 64], strides = [1, 1]} : vector<32x64xf32> to vector<2x64xf32>
    %76 = vector.extract_strided_slice %29 {offsets = [704, 0], sizes = [64, 32], strides = [1, 1]} : vector<1024x32xf32> to vector<64x32xf32>
    %cst_39 = arith.constant dense<0.000000e+00> : vector<2x32xf32>
    %77 = tpu.matmul %75, %76, %cst_39 {dimension_numbers = #tpu.dot_dimension_numbers<[1], [0], [0], [1], [0, 0, 1, 1], [], []>} : vector<2x64xf32>, vector<64x32xf32>, vector<2x32xf32> -> vector<2x32xf32>
    %78 = arith.addf %74, %77 : vector<2x32xf32>
    %79 = vector.extract_strided_slice %5 {offsets = [24, 0], sizes = [2, 64], strides = [1, 1]} : vector<32x64xf32> to vector<2x64xf32>
    %80 = vector.extract_strided_slice %29 {offsets = [768, 0], sizes = [64, 32], strides = [1, 1]} : vector<1024x32xf32> to vector<64x32xf32>
    %cst_40 = arith.constant dense<0.000000e+00> : vector<2x32xf32>
    %81 = tpu.matmul %79, %80, %cst_40 {dimension_numbers = #tpu.dot_dimension_numbers<[1], [0], [0], [1], [0, 0, 1, 1], [], []>} : vector<2x64xf32>, vector<64x32xf32>, vector<2x32xf32> -> vector<2x32xf32>
    %82 = arith.addf %78, %81 : vector<2x32xf32>
    %83 = vector.extract_strided_slice %5 {offsets = [26, 0], sizes = [2, 64], strides = [1, 1]} : vector<32x64xf32> to vector<2x64xf32>
    %84 = vector.extract_strided_slice %29 {offsets = [832, 0], sizes = [64, 32], strides = [1, 1]} : vector<1024x32xf32> to vector<64x32xf32>
    %cst_41 = arith.constant dense<0.000000e+00> : vector<2x32xf32>
    %85 = tpu.matmul %83, %84, %cst_41 {dimension_numbers = #tpu.dot_dimension_numbers<[1], [0], [0], [1], [0, 0, 1, 1], [], []>} : vector<2x64xf32>, vector<64x32xf32>, vector<2x32xf32> -> vector<2x32xf32>
    %86 = arith.addf %82, %85 : vector<2x32xf32>
    %87 = vector.extract_strided_slice %5 {offsets = [28, 0], sizes = [2, 64], strides = [1, 1]} : vector<32x64xf32> to vector<2x64xf32>
    %88 = vector.extract_strided_slice %29 {offsets = [896, 0], sizes = [64, 32], strides = [1, 1]} : vector<1024x32xf32> to vector<64x32xf32>
    %cst_42 = arith.constant dense<0.000000e+00> : vector<2x32xf32>
    %89 = tpu.matmul %87, %88, %cst_42 {dimension_numbers = #tpu.dot_dimension_numbers<[1], [0], [0], [1], [0, 0, 1, 1], [], []>} : vector<2x64xf32>, vector<64x32xf32>, vector<2x32xf32> -> vector<2x32xf32>
    %90 = arith.addf %86, %89 : vector<2x32xf32>
    %91 = vector.extract_strided_slice %5 {offsets = [30, 0], sizes = [2, 64], strides = [1, 1]} : vector<32x64xf32> to vector<2x64xf32>
    %92 = vector.extract_strided_slice %29 {offsets = [960, 0], sizes = [64, 32], strides = [1, 1]} : vector<1024x32xf32> to vector<64x32xf32>
    %cst_43 = arith.constant dense<0.000000e+00> : vector<2x32xf32>
    %93 = tpu.matmul %91, %92, %cst_43 {dimension_numbers = #tpu.dot_dimension_numbers<[1], [0], [0], [1], [0, 0, 1, 1], [], []>} : vector<2x64xf32>, vector<64x32xf32>, vector<2x32xf32> -> vector<2x32xf32>
    %94 = arith.addf %90, %93 : vector<2x32xf32>
    %c0_44 = arith.constant 0 : index
    %c0_45 = arith.constant 0 : index
    %95 = vector.load %arg9[%c0_44, %c0_45] : memref<1x32xf32, #tpu.memory_space<vmem>>, vector<1x32xf32>
    %96 = vector.broadcast %95 : vector<1x32xf32> to vector<2x32xf32>
    %97 = arith.addf %94, %96 : vector<2x32xf32>
    %cst_46 = arith.constant 0.000000e+00 : f32
    %98 = vector.broadcast %cst_46 : f32 to vector<2x32xf32>
    %99 = arith.cmpf oge, %97, %98 : vector<2x32xf32>
    %cst_47 = arith.constant 0.00999999977 : f32
    %100 = vector.broadcast %cst_47 : f32 to vector<2x32xf32>
    %101 = arith.mulf %100, %97 : vector<2x32xf32>
    %102 = arith.select %99, %97, %101 : vector<2x32xi1>, vector<2x32xf32>
    %c0_48 = arith.constant 0 : index
    %c0_49 = arith.constant 0 : index
    %103 = vector.load %arg12[%c0_48, %c0_49] : memref<32x1xf32, #tpu.memory_space<vmem>>, vector<32x1xf32>
    %cst_50 = arith.constant dense<0.000000e+00> : vector<2x1xf32>
    %104 = tpu.matmul %17, %103, %cst_50 {dimension_numbers = #tpu.dot_dimension_numbers<[1], [0], [0], [1], [0, 0, 1, 1], [], []>} : vector<2x32xf32>, vector<32x1xf32>, vector<2x1xf32> -> vector<2x1xf32>
    %c0_51 = arith.constant 0 : index
    %c0_52 = arith.constant 0 : index
    %105 = vector.load %arg13[%c0_51, %c0_52] : memref<32x1xf32, #tpu.memory_space<vmem>>, vector<32x1xf32>
    %cst_53 = arith.constant dense<0.000000e+00> : vector<2x1xf32>
    %106 = tpu.matmul %102, %105, %cst_53 {dimension_numbers = #tpu.dot_dimension_numbers<[1], [0], [0], [1], [0, 0, 1, 1], [], []>} : vector<2x32xf32>, vector<32x1xf32>, vector<2x1xf32> -> vector<2x1xf32>
    %107 = arith.addf %104, %106 : vector<2x1xf32>
    %c0_54 = arith.constant 0 : index
    %c0_55 = arith.constant 0 : index
    %108 = vector.load %arg14[%c0_54, %c0_55] : memref<32x1xf32, #tpu.memory_space<vmem>>, vector<32x1xf32>
    %cst_56 = arith.constant dense<0.000000e+00> : vector<2x1xf32>
    %109 = tpu.matmul %28, %108, %cst_56 {dimension_numbers = #tpu.dot_dimension_numbers<[1], [0], [0], [1], [0, 0, 1, 1], [], []>} : vector<2x32xf32>, vector<32x1xf32>, vector<2x1xf32> -> vector<2x1xf32>
    %110 = arith.addf %107, %109 : vector<2x1xf32>
    %c0_57 = arith.constant 0 : index
    %c0_58 = arith.constant 0 : index
    %111 = vector.load %arg15[%c0_57, %c0_58] : memref<1x1xf32, #tpu.memory_space<vmem>>, vector<1x1xf32>
    %112 = vector.broadcast %111 : vector<1x1xf32> to vector<2x1xf32>
    %113 = arith.addf %110, %112 : vector<2x1xf32>
    %114 = arith.negf %113 : vector<2x1xf32>
    %115 = math.exp %114 : vector<2x1xf32>
    %cst_59 = arith.constant 1.000000e+00 : f32
    %116 = vector.broadcast %cst_59 : f32 to vector<2x1xf32>
    %117 = arith.addf %116, %115 : vector<2x1xf32>
    %118 = arith.divf %116, %117 : vector<2x1xf32>
    %c0_60 = arith.constant 0 : index
    %c0_61 = arith.constant 0 : index
    %119 = vector.load %arg17[%c0_60, %c0_61] : memref<2x1xf32, #tpu.memory_space<vmem>>, vector<2x1xf32>
    tpu.vector_store %arg17[%c0_60, %c0_61], %118 {strides = array<i32>} : memref<2x1xf32, #tpu.memory_space<vmem>>, vector<2x1xf32>,
    return
  }
  func.func @transform_0(%arg0: i32) -> (i32, i32) {
    %c0_i32 = arith.constant 0 : i32
    %c0_i32_0 = arith.constant 0 : i32
    %c0_i32_1 = arith.constant 0 : i32
    return %c0_i32, %c0_i32_0 : i32, i32
  }
  func.func @transform_1(%arg0: i32) -> (i32, i32) {
    %c0_i32 = arith.constant 0 : i32
    %c0_i32_0 = arith.constant 0 : i32
    %c0_i32_1 = arith.constant 0 : i32
    return %c0_i32, %c0_i32_0 : i32, i32
  }
  func.func @transform_2(%arg0: i32) -> (i32, i32) {
    %c0_i32 = arith.constant 0 : i32
    %c0_i32_0 = arith.constant 0 : i32
    %c0_i32_1 = arith.constant 0 : i32
    return %c0_i32, %c0_i32_0 : i32, i32
  }
  func.func @transform_3(%arg0: i32) -> (i32, i32) {
    %c0_i32 = arith.constant 0 : i32
    %c0_i32_0 = arith.constant 0 : i32
    %c0_i32_1 = arith.constant 0 : i32
    return %c0_i32, %c0_i32_0 : i32, i32
  }
  func.func @transform_4(%arg0: i32) -> (i32, i32) {
    %c0_i32 = arith.constant 0 : i32
    %c0_i32_0 = arith.constant 0 : i32
    %c0_i32_1 = arith.constant 0 : i32
    return %c0_i32, %c0_i32_0 : i32, i32
  }
  func.func @transform_5(%arg0: i32) -> (i32, i32) {
    %c0_i32 = arith.constant 0 : i32
    %c0_i32_0 = arith.constant 0 : i32
    %c0_i32_1 = arith.constant 0 : i32
    return %c0_i32, %c0_i32_0 : i32, i32
  }
  func.func @transform_6(%arg0: i32) -> (i32, i32) {
    %c0_i32 = arith.constant 0 : i32
    %c0_i32_0 = arith.constant 0 : i32
    %c0_i32_1 = arith.constant 0 : i32
    return %c0_i32, %c0_i32_0 : i32, i32
  }
  func.func @transform_7(%arg0: i32) -> (i32, i32) {
    %c0_i32 = arith.constant 0 : i32
    %c0_i32_0 = arith.constant 0 : i32
    %c0_i32_1 = arith.constant 0 : i32
    return %c0_i32, %c0_i32_0 : i32, i32
  }
  func.func @transform_8(%arg0: i32) -> (i32, i32) {
    %c0_i32 = arith.constant 0 : i32
    %c0_i32_0 = arith.constant 0 : i32
    %c0_i32_1 = arith.constant 0 : i32
    return %c0_i32, %c0_i32_0 : i32, i32
  }
  func.func @transform_9(%arg0: i32) -> (i32, i32) {
    %c0_i32 = arith.constant 0 : i32
    %c0_i32_0 = arith.constant 0 : i32
    %c0_i32_1 = arith.constant 0 : i32
    return %c0_i32, %c0_i32_0 : i32, i32
  }
  func.func @transform_10(%arg0: i32) -> (i32, i32) {
    %c0_i32 = arith.constant 0 : i32
    %c0_i32_0 = arith.constant 0 : i32
    %c0_i32_1 = arith.constant 0 : i32
    return %c0_i32, %c0_i32_0 : i32, i32
  }
  func.func @transform_11(%arg0: i32) -> (i32, i32) {
    %c0_i32 = arith.constant 0 : i32
    %c0_i32_0 = arith.constant 0 : i32
    %c0_i32_1 = arith.constant 0 : i32
    return %c0_i32, %c0_i32_0 : i32, i32
  }
  func.func @transform_12(%arg0: i32) -> (i32, i32) {
    %c0_i32 = arith.constant 0 : i32
    %c0_i32_0 = arith.constant 0 : i32
    %c0_i32_1 = arith.constant 0 : i32
    return %c0_i32, %c0_i32_0 : i32, i32
  }
  func.func @transform_13(%arg0: i32) -> (i32, i32) {
    %c0_i32 = arith.constant 0 : i32
    %c0_i32_0 = arith.constant 0 : i32
    %c0_i32_1 = arith.constant 0 : i32
    return %c0_i32, %c0_i32_0 : i32, i32
  }
  func.func @transform_14(%arg0: i32) -> (i32, i32) {
    %c0_i32 = arith.constant 0 : i32
    %c0_i32_0 = arith.constant 0 : i32
    %c0_i32_1 = arith.constant 0 : i32
    return %c0_i32, %c0_i32_0 : i32, i32
  }
  func.func @transform_15(%arg0: i32) -> (i32, i32) {
    %c0_i32 = arith.constant 0 : i32
    %c0_i32_0 = arith.constant 0 : i32
    %c0_i32_1 = arith.constant 0 : i32
    return %c0_i32, %c0_i32_0 : i32, i32
  }
  func.func @transform_16(%arg0: i32) -> (i32, i32) {
    %c0_i32 = arith.constant 0 : i32
    %c0_i32_0 = arith.constant 0 : i32
    %c0_i32_1 = arith.constant 0 : i32
    return %c0_i32, %c0_i32_0 : i32, i32
  }
}

</mosaic_0001>

<llo_original>
// kernel: forward.1
$region0: #{forward.1}
  #allocation0 [shape = 'u32[]', space=smem, size = 0x4, offset = 0x4, fixed_abs, tag = 'smem constant byte address 0x4 - core index']
  #allocation1 [shape = 'u32[144,128]{1,0:T(1,128)}', space=vmem, size = 0x12000, scoped, tag = 'internal scratch']
  #allocation2 [shape = 'f32[1,1]{1,0:T(1,128)S(1)}', space=vmem, size = 0x200, scoped, tag = 'scoped memory for forward.1']
  %s0 = inlined_call_operand.vmem [shape: f32[2,256], index: 0, kind: input, shape index: {}]
  %s1 = inlined_call_operand.vmem [shape: f32[32,128], index: 1, kind: input, shape index: {}]
  %s2 = inlined_call_operand.vmem [shape: f32[2,64], index: 2, kind: input, shape index: {}]
  %s3 = inlined_call_operand.vmem [shape: f32[256,32], index: 3, kind: input, shape index: {}]
  %s4 = inlined_call_operand.vmem [shape: f32[1,32], index: 4, kind: input, shape index: {}]
  %s5 = inlined_call_operand.vmem [shape: f32[128,64], index: 5, kind: input, shape index: {}]
  %s6 = inlined_call_operand.vmem [shape: f32[1,64], index: 6, kind: input, shape index: {}]
  %s7 = inlined_call_operand.vmem [shape: f32[1024,32], index: 7, kind: input, shape index: {}]
  %s8 = inlined_call_operand.vmem [shape: f32[1,32], index: 8, kind: input, shape index: {}]
  %s9 = inlined_call_operand.vmem [shape: f32[64,32], index: 9, kind: input, shape index: {}]
  %s10 = inlined_call_operand.vmem [shape: f32[1,32], index: 10, kind: input, shape index: {}]
  %s11 = inlined_call_operand.vmem [shape: f32[32,1], index: 11, kind: input, shape index: {}]
  %s12 = inlined_call_operand.vmem [shape: f32[32,1], index: 12, kind: input, shape index: {}]
  %s13 = inlined_call_operand.vmem [shape: f32[32,1], index: 13, kind: input, shape index: {}]
  %s14 = inlined_call_operand.<no memory space> [shape: f32[1,1], index: 14, kind: input, shape index: {}]
  %s15 = inlined_call_operand.vmem [shape: f32[32,64], index: 15, kind: output, shape index: {0}]
  %s16 = inlined_call_operand.vmem [shape: f32[2,1], index: 16, kind: output, shape index: {1}]
  %17 = xla_tuple %s15, %s16
  %s18 = sld [smem:[#allocation0]]
  $region78: #{forward.1} parent=0
    _
  %s20 = ssub.s32 1, %s18
  %s21 = scalar_select 0, %s20, %s18
  %v22 = vstv %s14
  %23 = vst [vmem:[#allocation2] sm:$0x1] %v22
  // Predicated region
  $region2: #{forward.1} parent=0 // pred_check
    _
  $region3: #{forward.1} parent=0 // pred_check_branch
    %25 = sbr.rel (0) target = $region5
  $region4: #{forward.1} parent=0 // pred_region
    _
  $region5: #{forward.1} parent=0 // pred_fallthru
    _
  // Predicated region
  $region6: #{forward.1} parent=0 // pred_check
    _
  $region7: #{forward.1} parent=0 // pred_check_branch
    %27 = sbr.rel (0) target = $region9
  $region8: #{forward.1} parent=0 // pred_region
    _
  $region9: #{forward.1} parent=0 // pred_fallthru
    _
  // Predicated region
  $region10: #{forward.1} parent=0 // pred_check
    _
  $region11: #{forward.1} parent=0 // pred_check_branch
    %29 = sbr.rel (0) target = $region13
  $region12: #{forward.1} parent=0 // pred_region
    _
  $region13: #{forward.1} parent=0 // pred_fallthru
    _
  // Predicated region
  $region14: #{forward.1} parent=0 // pred_check
    _
  $region15: #{forward.1} parent=0 // pred_check_branch
    %31 = sbr.rel (0) target = $region17
  $region16: #{forward.1} parent=0 // pred_region
    _
  $region17: #{forward.1} parent=0 // pred_fallthru
    _
  // Predicated region
  $region18: #{forward.1} parent=0 // pred_check
    _
  $region19: #{forward.1} parent=0 // pred_check_branch
    %33 = sbr.rel (0) target = $region21
  $region20: #{forward.1} parent=0 // pred_region
    _
  $region21: #{forward.1} parent=0 // pred_fallthru
    _
  // Predicated region
  $region22: #{forward.1} parent=0 // pred_check
    _
  $region23: #{forward.1} parent=0 // pred_check_branch
    %35 = sbr.rel (0) target = $region25
  $region24: #{forward.1} parent=0 // pred_region
    _
  $region25: #{forward.1} parent=0 // pred_fallthru
    _
  // Predicated region
  $region26: #{forward.1} parent=0 // pred_check
    _
  $region27: #{forward.1} parent=0 // pred_check_branch
    %37 = sbr.rel (0) target = $region29
  $region28: #{forward.1} parent=0 // pred_region
    _
  $region29: #{forward.1} parent=0 // pred_fallthru
    _
  // Predicated region
  $region30: #{forward.1} parent=0 // pred_check
    _
  $region31: #{forward.1} parent=0 // pred_check_branch
    %39 = sbr.rel (0) target = $region33
  $region32: #{forward.1} parent=0 // pred_region
    _
  $region33: #{forward.1} parent=0 // pred_fallthru
    _
  // Predicated region
  $region34: #{forward.1} parent=0 // pred_check
    _
  $region35: #{forward.1} parent=0 // pred_check_branch
    %41 = sbr.rel (0) target = $region37
  $region36: #{forward.1} parent=0 // pred_region
    _
  $region37: #{forward.1} parent=0 // pred_fallthru
    _
  // Predicated region
  $region38: #{forward.1} parent=0 // pred_check
    _
  $region39: #{forward.1} parent=0 // pred_check_branch
    %43 = sbr.rel (0) target = $region41
  $region40: #{forward.1} parent=0 // pred_region
    _
  $region41: #{forward.1} parent=0 // pred_fallthru
    _
  // Predicated region
  $region42: #{forward.1} parent=0 // pred_check
    _
  $region43: #{forward.1} parent=0 // pred_check_branch
    %45 = sbr.rel (0) target = $region45
  $region44: #{forward.1} parent=0 // pred_region
    _
  $region45: #{forward.1} parent=0 // pred_fallthru
    _
  // Predicated region
  $region46: #{forward.1} parent=0 // pred_check
    _
  $region47: #{forward.1} parent=0 // pred_check_branch
    %47 = sbr.rel (0) target = $region49
  $region48: #{forward.1} parent=0 // pred_region
    _
  $region49: #{forward.1} parent=0 // pred_fallthru
    _
  // Predicated region
  $region50: #{forward.1} parent=0 // pred_check
    _
  $region51: #{forward.1} parent=0 // pred_check_branch
    %49 = sbr.rel (0) target = $region53
  $region52: #{forward.1} parent=0 // pred_region
    _
  $region53: #{forward.1} parent=0 // pred_fallthru
    _
  // Predicated region
  $region54: #{forward.1} parent=0 // pred_check
    _
  $region55: #{forward.1} parent=0 // pred_check_branch
    %51 = sbr.rel (0) target = $region57
  $region56: #{forward.1} parent=0 // pred_region
    _
  $region57: #{forward.1} parent=0 // pred_fallthru
    _
  // Predicated region
  $region58: #{forward.1} parent=0 // pred_check
    _
  $region59: #{forward.1} parent=0 // pred_check_branch
    %53 = sbr.rel (0) target = $region61
  $region60: #{forward.1} parent=0 // pred_region
    _
  $region61: #{forward.1} parent=0 // pred_fallthru
    _
  %v54 = vld [vmem:[%s1] sm:$0xff]
  %v55 = vld [vmem:[%s1 + $0x8] sm:$0xff]
  %v56 = vld [vmem:[%s1 + $0x10] sm:$0xff]
  %v57 = vld [vmem:[%s1 + $0x18] sm:$0xff]
  %v58 = vld [vmem:[%s5] sm:$0xff]
  %v59 = vld [vmem:[%s5 + $0x8] sm:$0xff]
  %v60 = vld [vmem:[%s5 + $0x10] sm:$0xff]
  %v61 = vld [vmem:[%s5 + $0x18] sm:$0xff]
  %v62 = vld [vmem:[%s5 + $0x20] sm:$0xff]
  %v63 = vld [vmem:[%s5 + $0x28] sm:$0xff]
  %v64 = vld [vmem:[%s5 + $0x30] sm:$0xff]
  %v65 = vld [vmem:[%s5 + $0x38] sm:$0xff]
  %v66 = vld [vmem:[%s5 + $0x40] sm:$0xff]
  %v67 = vld [vmem:[%s5 + $0x48] sm:$0xff]
  %v68 = vld [vmem:[%s5 + $0x50] sm:$0xff]
  %v69 = vld [vmem:[%s5 + $0x58] sm:$0xff]
  %v70 = vld [vmem:[%s5 + $0x60] sm:$0xff]
  %v71 = vld [vmem:[%s5 + $0x68] sm:$0xff]
  %v72 = vld [vmem:[%s5 + $0x70] sm:$0xff]
  %v73 = vld [vmem:[%s5 + $0x78] sm:$0xff]
  %v74 = vld [vmem:[%s6] sm:$0x1]
  %v76 = vlaneseq
  %v77 = vshrl.u32 %v76, 7
  %v78 = vsub.s32 0, %v77
  %v79 = vrot.slane %v74, %v78
  %81 = vmatprep.subr.mxu0 0.0
  %82 = vmatpush1.msra.mxu0 %v73
  %83 = vmatprep.subr.mxu0 0.0
  %84 = vmatpush1.msra.mxu0 %v72
  %85 = vmatprep.subr.mxu0 0.0
  %86 = vmatpush1.msra.mxu0 %v71
  %87 = vmatprep.subr.mxu0 0.0
  %88 = vmatpush1.msra.mxu0 %v70
  %89 = vmatprep.subr.mxu0 0.0
  %90 = vmatpush1.msra.mxu0 %v69
  %91 = vmatprep.subr.mxu0 0.0
  %92 = vmatpush1.msra.mxu0 %v68
  %93 = vmatprep.subr.mxu0 0.0
  %94 = vmatpush1.msra.mxu0 %v67
  %95 = vmatprep.subr.mxu0 0.0
  %96 = vmatpush1.msra.mxu0 %v66
  %97 = vmatprep.subr.mxu0 0.0
  %98 = vmatpush1.msra.mxu0 %v65
  %99 = vmatprep.subr.mxu0 0.0
  %100 = vmatpush1.msra.mxu0 %v64
  %101 = vmatprep.subr.mxu0 0.0
  %102 = vmatpush1.msra.mxu0 %v63
  %103 = vmatprep.subr.mxu0 0.0
  %104 = vmatpush1.msra.mxu0 %v62
  %105 = vmatprep.subr.mxu0 0.0
  %106 = vmatpush1.msra.mxu0 %v61
  %107 = vmatprep.subr.mxu0 0.0
  %108 = vmatpush1.msra.mxu0 %v60
  %109 = vmatprep.subr.mxu0 0.0
  %110 = vmatpush1.msra.mxu0 %v59
  %111 = vmatprep.subr.mxu0 0.0
  %112 = vmatpush1.msra.mxu0 %v58
  %113 = vmatprep.subr.mxu0 0.0
  %114 = vmatpush2.msra.mxu0 0.0
  %115 = vmatprep.subr.mxu0 0.0
  %116 = vmatpush2.msra.mxu0 0.0
  %117 = vmatprep.subr.mxu0 0.0
  %118 = vmatpush2.msra.mxu0 0.0
  %119 = vmatprep.subr.mxu0 0.0
  %120 = vmatpush2.msra.mxu0 0.0
  %121 = vmatprep.subr.mxu0 0.0
  %122 = vmatpush2.msra.mxu0 0.0
  %123 = vmatprep.subr.mxu0 0.0
  %124 = vmatpush2.msra.mxu0 0.0
  %125 = vmatprep.subr.mxu0 0.0
  %126 = vmatpush2.msra.mxu0 0.0
  %127 = vmatprep.subr.mxu0 0.0
  %128 = vmatpush2.msra.mxu0 0.0
  %129 = vmatprep.subr.mxu0 0.0
  %130 = vmatpush2.msra.mxu0 0.0
  %131 = vmatprep.subr.mxu0 0.0
  %132 = vmatpush2.msra.mxu0 0.0
  %133 = vmatprep.subr.mxu0 0.0
  %134 = vmatpush2.msra.mxu0 0.0
  %135 = vmatprep.subr.mxu0 0.0
  %136 = vmatpush2.msra.mxu0 0.0
  %137 = vmatprep.subr.mxu0 0.0
  %138 = vmatpush2.msra.mxu0 0.0
  %139 = vmatprep.subr.mxu0 0.0
  %140 = vmatpush2.msra.mxu0 0.0
  %141 = vmatprep.subr.mxu0 0.0
  %142 = vmatpush2.msra.mxu0 0.0
  %143 = vmatprep.subr.mxu0 0.0
  %144 = vmatpush2.msra.mxu0 0.0
  %145 = vmatprep.mubr.f32.mxu0 0.0
  %146 = vmatmul.mubr.f32.gmra.mxu0 %v54
  %v147 = vpop.f32.mrf.mxu0
  %v148 = vadd.f32 %v79, %v147
  %v149 = vpop.f32.mrf.mxu0
  %150 = vmatprep.mubr.f32.mxu0 0.0
  %151 = vmatmul.mubr.f32.gmra.mxu0 %v55
  %v152 = vpop.f32.mrf.mxu0
  %v153 = vadd.f32 %v79, %v152
  %v154 = vpop.f32.mrf.mxu0
  %155 = vmatprep.mubr.f32.mxu0 0.0
  %156 = vmatmul.mubr.f32.gmra.mxu0 %v56
  %v157 = vpop.f32.mrf.mxu0
  %v158 = vadd.f32 %v79, %v157
  %v159 = vpop.f32.mrf.mxu0
  %160 = vmatprep.mubr.f32.mxu0 0.0
  %161 = vmatmul.mubr.f32.gmra.mxu0 %v57
  %v162 = vpop.f32.mrf.mxu0
  %v163 = vadd.f32 %v79, %v162
  %v164 = vpop.f32.mrf.mxu0
  %165 = vdwg.mxu0
  %vm166 = vcmask 523264
  %167 = vst.msk [vmem:[%s15] sm:$0xff] %vm166, %v148
  %168 = vst.msk [vmem:[%s15 + $0x8] sm:$0xff] %vm166, %v153
  %169 = vst.msk [vmem:[%s15 + $0x10] sm:$0xff] %vm166, %v158
  %170 = vst.msk [vmem:[%s15 + $0x18] sm:$0xff] %vm166, %v163
  %v171 = vld [vmem:[%s0] sm:$0xf]
  %v172 = vld [vmem:[%s3] sm:$0xff]
  %v173 = vld [vmem:[%s3 + $0x8] sm:$0xff]
  %v174 = vld [vmem:[%s3 + $0x10] sm:$0xff]
  %v175 = vld [vmem:[%s3 + $0x18] sm:$0xff]
  %v176 = vld [vmem:[%s3 + $0x20] sm:$0xff]
  %v177 = vld [vmem:[%s3 + $0x28] sm:$0xff]
  %v178 = vld [vmem:[%s3 + $0x30] sm:$0xff]
  %v179 = vld [vmem:[%s3 + $0x38] sm:$0xff]
  %v180 = vld [vmem:[%s3 + $0x40] sm:$0xff]
  %v181 = vld [vmem:[%s3 + $0x48] sm:$0xff]
  %v182 = vld [vmem:[%s3 + $0x50] sm:$0xff]
  %v183 = vld [vmem:[%s3 + $0x58] sm:$0xff]
  %v184 = vld [vmem:[%s3 + $0x60] sm:$0xff]
  %v185 = vld [vmem:[%s3 + $0x68] sm:$0xff]
  %v186 = vld [vmem:[%s3 + $0x70] sm:$0xff]
  %v187 = vld [vmem:[%s3 + $0x78] sm:$0xff]
  %v188 = vld [vmem:[%s3 + $0x80] sm:$0xff]
  %v189 = vld [vmem:[%s3 + $0x88] sm:$0xff]
  %v190 = vld [vmem:[%s3 + $0x90] sm:$0xff]
  %v191 = vld [vmem:[%s3 + $0x98] sm:$0xff]
  %v192 = vld [vmem:[%s3 + $0xa0] sm:$0xff]
  %v193 = vld [vmem:[%s3 + $0xa8] sm:$0xff]
  %v194 = vld [vmem:[%s3 + $0xb0] sm:$0xff]
  %v195 = vld [vmem:[%s3 + $0xb8] sm:$0xff]
  %v196 = vld [vmem:[%s3 + $0xc0] sm:$0xff]
  %v197 = vld [vmem:[%s3 + $0xc8] sm:$0xff]
  %v198 = vld [vmem:[%s3 + $0xd0] sm:$0xff]
  %v199 = vld [vmem:[%s3 + $0xd8] sm:$0xff]
  %v200 = vld [vmem:[%s3 + $0xe0] sm:$0xff]
  %v201 = vld [vmem:[%s3 + $0xe8] sm:$0xff]
  %v202 = vld [vmem:[%s3 + $0xf0] sm:$0xff]
  %v203 = vld [vmem:[%s3 + $0xf8] sm:$0xff]
  %v204 = vld [vmem:[%s4] sm:$0x1]
  %v206 = vlaneseq
  %v207 = vshrl.u32 %v206, 7
  %v208 = vsub.s32 0, %v207
  %v209 = vrot.slane %v204, %v208
  %v213 = vunpack.c.l.s4 1983009808
  %v214 = vunpack.c.0.s8 %v213
  %v215 = vlaneseq
  %v216 = vshrl.u32 %v215, 7
  %v217 = vsub.s32 %v214, %v216
  %v218 = vrot.slane %v171, %v217
  %v219 = vcombine.high %v218, %v218
  %222 = vmatprep.subr.mxu0 0.0
  %223 = vmatpush1.msra.mxu0 %v187
  %224 = vmatprep.subr.mxu0 0.0
  %225 = vmatpush1.msra.mxu0 %v186
  %226 = vmatprep.subr.mxu0 0.0
  %227 = vmatpush1.msra.mxu0 %v185
  %228 = vmatprep.subr.mxu0 0.0
  %229 = vmatpush1.msra.mxu0 %v184
  %230 = vmatprep.subr.mxu0 0.0
  %231 = vmatpush1.msra.mxu0 %v183
  %232 = vmatprep.subr.mxu0 0.0
  %233 = vmatpush1.msra.mxu0 %v182
  %234 = vmatprep.subr.mxu0 0.0
  %235 = vmatpush1.msra.mxu0 %v181
  %236 = vmatprep.subr.mxu0 0.0
  %237 = vmatpush1.msra.mxu0 %v180
  %238 = vmatprep.subr.mxu0 0.0
  %239 = vmatpush1.msra.mxu0 %v179
  %240 = vmatprep.subr.mxu0 0.0
  %241 = vmatpush1.msra.mxu0 %v178
  %242 = vmatprep.subr.mxu0 0.0
  %243 = vmatpush1.msra.mxu0 %v177
  %244 = vmatprep.subr.mxu0 0.0
  %245 = vmatpush1.msra.mxu0 %v176
  %246 = vmatprep.subr.mxu0 0.0
  %247 = vmatpush1.msra.mxu0 %v175
  %248 = vmatprep.subr.mxu0 0.0
  %249 = vmatpush1.msra.mxu0 %v174
  %250 = vmatprep.subr.mxu0 0.0
  %251 = vmatpush1.msra.mxu0 %v173
  %252 = vmatprep.subr.mxu0 0.0
  %253 = vmatpush1.msra.mxu0 %v172
  %254 = vmatprep.subr.mxu0 0.0
  %255 = vmatpush2.msra.mxu0 %v203
  %256 = vmatprep.subr.mxu0 0.0
  %257 = vmatpush2.msra.mxu0 %v202
  %258 = vmatprep.subr.mxu0 0.0
  %259 = vmatpush2.msra.mxu0 %v201
  %260 = vmatprep.subr.mxu0 0.0
  %261 = vmatpush2.msra.mxu0 %v200
  %262 = vmatprep.subr.mxu0 0.0
  %263 = vmatpush2.msra.mxu0 %v199
  %264 = vmatprep.subr.mxu0 0.0
  %265 = vmatpush2.msra.mxu0 %v198
  %266 = vmatprep.subr.mxu0 0.0
  %267 = vmatpush2.msra.mxu0 %v197
  %268 = vmatprep.subr.mxu0 0.0
  %269 = vmatpush2.msra.mxu0 %v196
  %270 = vmatprep.subr.mxu0 0.0
  %271 = vmatpush2.msra.mxu0 %v195
  %272 = vmatprep.subr.mxu0 0.0
  %273 = vmatpush2.msra.mxu0 %v194
  %274 = vmatprep.subr.mxu0 0.0
  %275 = vmatpush2.msra.mxu0 %v193
  %276 = vmatprep.subr.mxu0 0.0
  %277 = vmatpush2.msra.mxu0 %v192
  %278 = vmatprep.subr.mxu0 0.0
  %279 = vmatpush2.msra.mxu0 %v191
  %280 = vmatprep.subr.mxu0 0.0
  %281 = vmatpush2.msra.mxu0 %v190
  %282 = vmatprep.subr.mxu0 0.0
  %283 = vmatpush2.msra.mxu0 %v189
  %284 = vmatprep.subr.mxu0 0.0
  %285 = vmatpush2.msra.mxu0 %v188
  %286 = vmatprep.mubr.f32.mxu0 %v219
  %287 = vmatmul.mubr.f32.gmra.mxu0 %v218
  %v288 = vpop.f32.mrf.mxu0
  %v289 = vadd.f32 %v209, %v288
  %v290 = vpop.f32.mrf.mxu0
  %291 = vdwg.mxu0
  %vm292 = vcmp.ge.f32.partialorder %v289, 0.0
  %v293 = vmul.f32 %v289, 0.1
  %v294 = vsel %vm292, %v289, %v293
  %v295 = vld [vmem:[%s2] sm:$0x3]
  %v296 = vld [vmem:[%s9] sm:$0xff]
  %v297 = vld [vmem:[%s9 + $0x8] sm:$0xff]
  %v298 = vld [vmem:[%s9 + $0x10] sm:$0xff]
  %v299 = vld [vmem:[%s9 + $0x18] sm:$0xff]
  %v300 = vld [vmem:[%s9 + $0x20] sm:$0xff]
  %v301 = vld [vmem:[%s9 + $0x28] sm:$0xff]
  %v302 = vld [vmem:[%s9 + $0x30] sm:$0xff]
  %v303 = vld [vmem:[%s9 + $0x38] sm:$0xff]
  %v304 = vld [vmem:[%s10] sm:$0x1]
  %v306 = vlaneseq
  %v307 = vshrl.u32 %v306, 7
  %v308 = vsub.s32 0, %v307
  %v309 = vrot.slane %v304, %v308
  %v312 = vsel %vm166, %v295, 0
  %314 = vmatprep.subr.mxu0 0.0
  %315 = vmatpush1.msra.mxu0 0.0
  %316 = vmatprep.subr.mxu0 0.0
  %317 = vmatpush1.msra.mxu0 0.0
  %318 = vmatprep.subr.mxu0 0.0
  %319 = vmatpush1.msra.mxu0 0.0
  %320 = vmatprep.subr.mxu0 0.0
  %321 = vmatpush1.msra.mxu0 0.0
  %322 = vmatprep.subr.mxu0 0.0
  %323 = vmatpush1.msra.mxu0 0.0
  %324 = vmatprep.subr.mxu0 0.0
  %325 = vmatpush1.msra.mxu0 0.0
  %326 = vmatprep.subr.mxu0 0.0
  %327 = vmatpush1.msra.mxu0 0.0
  %328 = vmatprep.subr.mxu0 0.0
  %329 = vmatpush1.msra.mxu0 0.0
  %330 = vmatprep.subr.mxu0 0.0
  %331 = vmatpush1.msra.mxu0 %v303
  %332 = vmatprep.subr.mxu0 0.0
  %333 = vmatpush1.msra.mxu0 %v302
  %334 = vmatprep.subr.mxu0 0.0
  %335 = vmatpush1.msra.mxu0 %v301
  %336 = vmatprep.subr.mxu0 0.0
  %337 = vmatpush1.msra.mxu0 %v300
  %338 = vmatprep.subr.mxu0 0.0
  %339 = vmatpush1.msra.mxu0 %v299
  %340 = vmatprep.subr.mxu0 0.0
  %341 = vmatpush1.msra.mxu0 %v298
  %342 = vmatprep.subr.mxu0 0.0
  %343 = vmatpush1.msra.mxu0 %v297
  %344 = vmatprep.subr.mxu0 0.0
  %345 = vmatpush1.msra.mxu0 %v296
  %346 = vmatprep.subr.mxu0 0.0
  %347 = vmatpush2.msra.mxu0 0.0
  %348 = vmatprep.subr.mxu0 0.0
  %349 = vmatpush2.msra.mxu0 0.0
  %350 = vmatprep.subr.mxu0 0.0
  %351 = vmatpush2.msra.mxu0 0.0
  %352 = vmatprep.subr.mxu0 0.0
  %353 = vmatpush2.msra.mxu0 0.0
  %354 = vmatprep.subr.mxu0 0.0
  %355 = vmatpush2.msra.mxu0 0.0
  %356 = vmatprep.subr.mxu0 0.0
  %357 = vmatpush2.msra.mxu0 0.0
  %358 = vmatprep.subr.mxu0 0.0
  %359 = vmatpush2.msra.mxu0 0.0
  %360 = vmatprep.subr.mxu0 0.0
  %361 = vmatpush2.msra.mxu0 0.0
  %362 = vmatprep.subr.mxu0 0.0
  %363 = vmatpush2.msra.mxu0 0.0
  %364 = vmatprep.subr.mxu0 0.0
  %365 = vmatpush2.msra.mxu0 0.0
  %366 = vmatprep.subr.mxu0 0.0
  %367 = vmatpush2.msra.mxu0 0.0
  %368 = vmatprep.subr.mxu0 0.0
  %369 = vmatpush2.msra.mxu0 0.0
  %370 = vmatprep.subr.mxu0 0.0
  %371 = vmatpush2.msra.mxu0 0.0
  %372 = vmatprep.subr.mxu0 0.0
  %373 = vmatpush2.msra.mxu0 0.0
  %374 = vmatprep.subr.mxu0 0.0
  %375 = vmatpush2.msra.mxu0 0.0
  %376 = vmatprep.subr.mxu0 0.0
  %377 = vmatpush2.msra.mxu0 0.0
  %378 = vmatprep.mubr.f32.mxu0 0.0
  %379 = vmatmul.mubr.f32.gmra.mxu0 %v312
  %v380 = vpop.f32.mrf.mxu0
  %v381 = vadd.f32 %v309, %v380
  %v382 = vpop.f32.mrf.mxu0
  %383 = vdwg.mxu0
  %vm384 = vcmp.ge.f32.partialorder %v381, 0.0
  %v385 = vmul.f32 %v381, 0.1
  %v386 = vsel %vm384, %v381, %v385
  %v387 = vld [vmem:[%s7] sm:$0xff]
  %v388 = vld [vmem:[%s7 + $0x8] sm:$0xff]
  %v389 = vld [vmem:[%s7 + $0x10] sm:$0xff]
  %v390 = vld [vmem:[%s7 + $0x18] sm:$0xff]
  %v391 = vld [vmem:[%s7 + $0x20] sm:$0xff]
  %v392 = vld [vmem:[%s7 + $0x28] sm:$0xff]
  %v393 = vld [vmem:[%s7 + $0x30] sm:$0xff]
  %v394 = vld [vmem:[%s7 + $0x38] sm:$0xff]
  %v395 = vld [vmem:[%s7 + $0x40] sm:$0xff]
  %v396 = vld [vmem:[%s7 + $0x48] sm:$0xff]
  %v397 = vld [vmem:[%s7 + $0x50] sm:$0xff]
  %v398 = vld [vmem:[%s7 + $0x58] sm:$0xff]
  %v399 = vld [vmem:[%s7 + $0x60] sm:$0xff]
  %v400 = vld [vmem:[%s7 + $0x68] sm:$0xff]
  %v401 = vld [vmem:[%s7 + $0x70] sm:$0xff]
  %v402 = vld [vmem:[%s7 + $0x78] sm:$0xff]
  %v403 = vld [vmem:[%s7 + $0x80] sm:$0xff]
  %v404 = vld [vmem:[%s7 + $0x88] sm:$0xff]
  %v405 = vld [vmem:[%s7 + $0x90] sm:$0xff]
  %v406 = vld [vmem:[%s7 + $0x98] sm:$0xff]
  %v407 = vld [vmem:[%s7 + $0xa0] sm:$0xff]
  %v408 = vld [vmem:[%s7 + $0xa8] sm:$0xff]
  %v409 = vld [vmem:[%s7 + $0xb0] sm:$0xff]
  %v410 = vld [vmem:[%s7 + $0xb8] sm:$0xff]
  %v411 = vld [vmem:[%s7 + $0xc0] sm:$0xff]
  %v412 = vld [vmem:[%s7 + $0xc8] sm:$0xff]
  %v413 = vld [vmem:[%s7 + $0xd0] sm:$0xff]
  %v414 = vld [vmem:[%s7 + $0xd8] sm:$0xff]
  %v415 = vld [vmem:[%s7 + $0xe0] sm:$0xff]
  %v416 = vld [vmem:[%s7 + $0xe8] sm:$0xff]
  %v417 = vld [vmem:[%s7 + $0xf0] sm:$0xff]
  %v418 = vld [vmem:[%s7 + $0xf8] sm:$0xff]
  %v419 = vld [vmem:[%s7 + $0x100] sm:$0xff]
  %v420 = vld [vmem:[%s7 + $0x108] sm:$0xff]
  %v421 = vld [vmem:[%s7 + $0x110] sm:$0xff]
  %v422 = vld [vmem:[%s7 + $0x118] sm:$0xff]
  %v423 = vld [vmem:[%s7 + $0x120] sm:$0xff]
  %v424 = vld [vmem:[%s7 + $0x128] sm:$0xff]
  %v425 = vld [vmem:[%s7 + $0x130] sm:$0xff]
  %v426 = vld [vmem:[%s7 + $0x138] sm:$0xff]
  %v427 = vld [vmem:[%s7 + $0x140] sm:$0xff]
  %v428 = vld [vmem:[%s7 + $0x148] sm:$0xff]
  %v429 = vld [vmem:[%s7 + $0x150] sm:$0xff]
  %v430 = vld [vmem:[%s7 + $0x158] sm:$0xff]
  %v431 = vld [vmem:[%s7 + $0x160] sm:$0xff]
  %v432 = vld [vmem:[%s7 + $0x168] sm:$0xff]
  %v433 = vld [vmem:[%s7 + $0x170] sm:$0xff]
  %v434 = vld [vmem:[%s7 + $0x178] sm:$0xff]
  %v435 = vld [vmem:[%s7 + $0x180] sm:$0xff]
  %v436 = vld [vmem:[%s7 + $0x188] sm:$0xff]
  %v437 = vld [vmem:[%s7 + $0x190] sm:$0xff]
  %v438 = vld [vmem:[%s7 + $0x198] sm:$0xff]
  %v439 = vld [vmem:[%s7 + $0x1a0] sm:$0xff]
  %v440 = vld [vmem:[%s7 + $0x1a8] sm:$0xff]
  %v441 = vld [vmem:[%s7 + $0x1b0] sm:$0xff]
  %v442 = vld [vmem:[%s7 + $0x1b8] sm:$0xff]
  %v443 = vld [vmem:[%s7 + $0x1c0] sm:$0xff]
  %v444 = vld [vmem:[%s7 + $0x1c8] sm:$0xff]
  %v445 = vld [vmem:[%s7 + $0x1d0] sm:$0xff]
  %v446 = vld [vmem:[%s7 + $0x1d8] sm:$0xff]
  %v447 = vld [vmem:[%s7 + $0x1e0] sm:$0xff]
  %v448 = vld [vmem:[%s7 + $0x1e8] sm:$0xff]
  %v449 = vld [vmem:[%s7 + $0x1f0] sm:$0xff]
  %v450 = vld [vmem:[%s7 + $0x1f8] sm:$0xff]
  %v451 = vld [vmem:[%s7 + $0x200] sm:$0xff]
  %v452 = vld [vmem:[%s7 + $0x208] sm:$0xff]
  %v453 = vld [vmem:[%s7 + $0x210] sm:$0xff]
  %v454 = vld [vmem:[%s7 + $0x218] sm:$0xff]
  %v455 = vld [vmem:[%s7 + $0x220] sm:$0xff]
  %v456 = vld [vmem:[%s7 + $0x228] sm:$0xff]
  %v457 = vld [vmem:[%s7 + $0x230] sm:$0xff]
  %v458 = vld [vmem:[%s7 + $0x238] sm:$0xff]
  %v459 = vld [vmem:[%s7 + $0x240] sm:$0xff]
  %v460 = vld [vmem:[%s7 + $0x248] sm:$0xff]
  %v461 = vld [vmem:[%s7 + $0x250] sm:$0xff]
  %v462 = vld [vmem:[%s7 + $0x258] sm:$0xff]
  %v463 = vld [vmem:[%s7 + $0x260] sm:$0xff]
  %v464 = vld [vmem:[%s7 + $0x268] sm:$0xff]
  %v465 = vld [vmem:[%s7 + $0x270] sm:$0xff]
  %v466 = vld [vmem:[%s7 + $0x278] sm:$0xff]
  %v467 = vld [vmem:[%s7 + $0x280] sm:$0xff]
  %v468 = vld [vmem:[%s7 + $0x288] sm:$0xff]
  %v469 = vld [vmem:[%s7 + $0x290] sm:$0xff]
  %v470 = vld [vmem:[%s7 + $0x298] sm:$0xff]
  %v471 = vld [vmem:[%s7 + $0x2a0] sm:$0xff]
  %v472 = vld [vmem:[%s7 + $0x2a8] sm:$0xff]
  %v473 = vld [vmem:[%s7 + $0x2b0] sm:$0xff]
  %v474 = vld [vmem:[%s7 + $0x2b8] sm:$0xff]
  %v475 = vld [vmem:[%s7 + $0x2c0] sm:$0xff]
  %v476 = vld [vmem:[%s7 + $0x2c8] sm:$0xff]
  %v477 = vld [vmem:[%s7 + $0x2d0] sm:$0xff]
  %v478 = vld [vmem:[%s7 + $0x2d8] sm:$0xff]
  %v479 = vld [vmem:[%s7 + $0x2e0] sm:$0xff]
  %v480 = vld [vmem:[%s7 + $0x2e8] sm:$0xff]
  %v481 = vld [vmem:[%s7 + $0x2f0] sm:$0xff]
  %v482 = vld [vmem:[%s7 + $0x2f8] sm:$0xff]
  %v483 = vld [vmem:[%s7 + $0x300] sm:$0xff]
  %v484 = vld [vmem:[%s7 + $0x308] sm:$0xff]
  %v485 = vld [vmem:[%s7 + $0x310] sm:$0xff]
  %v486 = vld [vmem:[%s7 + $0x318] sm:$0xff]
  %v487 = vld [vmem:[%s7 + $0x320] sm:$0xff]
  %v488 = vld [vmem:[%s7 + $0x328] sm:$0xff]
  %v489 = vld [vmem:[%s7 + $0x330] sm:$0xff]
  %v490 = vld [vmem:[%s7 + $0x338] sm:$0xff]
  %v491 = vld [vmem:[%s7 + $0x340] sm:$0xff]
  %v492 = vld [vmem:[%s7 + $0x348] sm:$0xff]
  %v493 = vld [vmem:[%s7 + $0x350] sm:$0xff]
  %v494 = vld [vmem:[%s7 + $0x358] sm:$0xff]
  %v495 = vld [vmem:[%s7 + $0x360] sm:$0xff]
  %v496 = vld [vmem:[%s7 + $0x368] sm:$0xff]
  %v497 = vld [vmem:[%s7 + $0x370] sm:$0xff]
  %v498 = vld [vmem:[%s7 + $0x378] sm:$0xff]
  %v499 = vld [vmem:[%s7 + $0x380] sm:$0xff]
  %v500 = vld [vmem:[%s7 + $0x388] sm:$0xff]
  %v501 = vld [vmem:[%s7 + $0x390] sm:$0xff]
  %v502 = vld [vmem:[%s7 + $0x398] sm:$0xff]
  %v503 = vld [vmem:[%s7 + $0x3a0] sm:$0xff]
  %v504 = vld [vmem:[%s7 + $0x3a8] sm:$0xff]
  %v505 = vld [vmem:[%s7 + $0x3b0] sm:$0xff]
  %v506 = vld [vmem:[%s7 + $0x3b8] sm:$0xff]
  %v507 = vld [vmem:[%s7 + $0x3c0] sm:$0xff]
  %v508 = vld [vmem:[%s7 + $0x3c8] sm:$0xff]
  %v509 = vld [vmem:[%s7 + $0x3d0] sm:$0xff]
  %v510 = vld [vmem:[%s7 + $0x3d8] sm:$0xff]
  %v511 = vld [vmem:[%s7 + $0x3e0] sm:$0xff]
  %v512 = vld [vmem:[%s7 + $0x3e8] sm:$0xff]
  %v513 = vld [vmem:[%s7 + $0x3f0] sm:$0xff]
  %v514 = vld [vmem:[%s7 + $0x3f8] sm:$0xff]
  %v516 = vrot.slane %v148, 2
  %v517 = vsel %vm166, %v516, 0
  %519 = vmatprep.subr.mxu0 0.0
  %520 = vmatpush1.msra.mxu0 0.0
  %521 = vmatprep.subr.mxu0 0.0
  %522 = vmatpush1.msra.mxu0 0.0
  %523 = vmatprep.subr.mxu0 0.0
  %524 = vmatpush1.msra.mxu0 0.0
  %525 = vmatprep.subr.mxu0 0.0
  %526 = vmatpush1.msra.mxu0 0.0
  %527 = vmatprep.subr.mxu0 0.0
  %528 = vmatpush1.msra.mxu0 0.0
  %529 = vmatprep.subr.mxu0 0.0
  %530 = vmatpush1.msra.mxu0 0.0
  %531 = vmatprep.subr.mxu0 0.0
  %532 = vmatpush1.msra.mxu0 0.0
  %533 = vmatprep.subr.mxu0 0.0
  %534 = vmatpush1.msra.mxu0 0.0
  %535 = vmatprep.subr.mxu0 0.0
  %536 = vmatpush1.msra.mxu0 %v402
  %537 = vmatprep.subr.mxu0 0.0
  %538 = vmatpush1.msra.mxu0 %v401
  %539 = vmatprep.subr.mxu0 0.0
  %540 = vmatpush1.msra.mxu0 %v400
  %541 = vmatprep.subr.mxu0 0.0
  %542 = vmatpush1.msra.mxu0 %v399
  %543 = vmatprep.subr.mxu0 0.0
  %544 = vmatpush1.msra.mxu0 %v398
  %545 = vmatprep.subr.mxu0 0.0
  %546 = vmatpush1.msra.mxu0 %v397
  %547 = vmatprep.subr.mxu0 0.0
  %548 = vmatpush1.msra.mxu0 %v396
  %549 = vmatprep.subr.mxu0 0.0
  %550 = vmatpush1.msra.mxu0 %v395
  %551 = vmatprep.subr.mxu0 0.0
  %552 = vmatpush2.msra.mxu0 0.0
  %553 = vmatprep.subr.mxu0 0.0
  %554 = vmatpush2.msra.mxu0 0.0
  %555 = vmatprep.subr.mxu0 0.0
  %556 = vmatpush2.msra.mxu0 0.0
  %557 = vmatprep.subr.mxu0 0.0
  %558 = vmatpush2.msra.mxu0 0.0
  %559 = vmatprep.subr.mxu0 0.0
  %560 = vmatpush2.msra.mxu0 0.0
  %561 = vmatprep.subr.mxu0 0.0
  %562 = vmatpush2.msra.mxu0 0.0
  %563 = vmatprep.subr.mxu0 0.0
  %564 = vmatpush2.msra.mxu0 0.0
  %565 = vmatprep.subr.mxu0 0.0
  %566 = vmatpush2.msra.mxu0 0.0
  %567 = vmatprep.subr.mxu0 0.0
  %568 = vmatpush2.msra.mxu0 0.0
  %569 = vmatprep.subr.mxu0 0.0
  %570 = vmatpush2.msra.mxu0 0.0
  %571 = vmatprep.subr.mxu0 0.0
  %572 = vmatpush2.msra.mxu0 0.0
  %573 = vmatprep.subr.mxu0 0.0
  %574 = vmatpush2.msra.mxu0 0.0
  %575 = vmatprep.subr.mxu0 0.0
  %576 = vmatpush2.msra.mxu0 0.0
  %577 = vmatprep.subr.mxu0 0.0
  %578 = vmatpush2.msra.mxu0 0.0
  %579 = vmatprep.subr.mxu0 0.0
  %580 = vmatpush2.msra.mxu0 0.0
  %581 = vmatprep.subr.mxu0 0.0
  %582 = vmatpush2.msra.mxu0 0.0
  %583 = vmatprep.mubr.f32.mxu0 0.0
  %584 = vmatmul.mubr.f32.gmra.mxu0 %v517
  %v585 = vpop.f32.mrf.mxu0
  %v586 = vadd.f32 0.0, %v585
  %v587 = vpop.f32.mrf.mxu0
  %588 = vdwg.mxu0
  %v589 = vsel %vm166, %v148, 0
  %591 = vmatprep.subr.mxu0 0.0
  %592 = vmatpush1.msra.mxu0 0.0
  %593 = vmatprep.subr.mxu0 0.0
  %594 = vmatpush1.msra.mxu0 0.0
  %595 = vmatprep.subr.mxu0 0.0
  %596 = vmatpush1.msra.mxu0 0.0
  %597 = vmatprep.subr.mxu0 0.0
  %598 = vmatpush1.msra.mxu0 0.0
  %599 = vmatprep.subr.mxu0 0.0
  %600 = vmatpush1.msra.mxu0 0.0
  %601 = vmatprep.subr.mxu0 0.0
  %602 = vmatpush1.msra.mxu0 0.0
  %603 = vmatprep.subr.mxu0 0.0
  %604 = vmatpush1.msra.mxu0 0.0
  %605 = vmatprep.subr.mxu0 0.0
  %606 = vmatpush1.msra.mxu0 0.0
  %607 = vmatprep.subr.mxu0 0.0
  %608 = vmatpush1.msra.mxu0 %v394
  %609 = vmatprep.subr.mxu0 0.0
  %610 = vmatpush1.msra.mxu0 %v393
  %611 = vmatprep.subr.mxu0 0.0
  %612 = vmatpush1.msra.mxu0 %v392
  %613 = vmatprep.subr.mxu0 0.0
  %614 = vmatpush1.msra.mxu0 %v391
  %615 = vmatprep.subr.mxu0 0.0
  %616 = vmatpush1.msra.mxu0 %v390
  %617 = vmatprep.subr.mxu0 0.0
  %618 = vmatpush1.msra.mxu0 %v389
  %619 = vmatprep.subr.mxu0 0.0
  %620 = vmatpush1.msra.mxu0 %v388
  %621 = vmatprep.subr.mxu0 0.0
  %622 = vmatpush1.msra.mxu0 %v387
  %623 = vmatprep.subr.mxu0 0.0
  %624 = vmatpush2.msra.mxu0 0.0
  %625 = vmatprep.subr.mxu0 0.0
  %626 = vmatpush2.msra.mxu0 0.0
  %627 = vmatprep.subr.mxu0 0.0
  %628 = vmatpush2.msra.mxu0 0.0
  %629 = vmatprep.subr.mxu0 0.0
  %630 = vmatpush2.msra.mxu0 0.0
  %631 = vmatprep.subr.mxu0 0.0
  %632 = vmatpush2.msra.mxu0 0.0
  %633 = vmatprep.subr.mxu0 0.0
  %634 = vmatpush2.msra.mxu0 0.0
  %635 = vmatprep.subr.mxu0 0.0
  %636 = vmatpush2.msra.mxu0 0.0
  %637 = vmatprep.subr.mxu0 0.0
  %638 = vmatpush2.msra.mxu0 0.0
  %639 = vmatprep.subr.mxu0 0.0
  %640 = vmatpush2.msra.mxu0 0.0
  %641 = vmatprep.subr.mxu0 0.0
  %642 = vmatpush2.msra.mxu0 0.0
  %643 = vmatprep.subr.mxu0 0.0
  %644 = vmatpush2.msra.mxu0 0.0
  %645 = vmatprep.subr.mxu0 0.0
  %646 = vmatpush2.msra.mxu0 0.0
  %647 = vmatprep.subr.mxu0 0.0
  %648 = vmatpush2.msra.mxu0 0.0
  %649 = vmatprep.subr.mxu0 0.0
  %650 = vmatpush2.msra.mxu0 0.0
  %651 = vmatprep.subr.mxu0 0.0
  %652 = vmatpush2.msra.mxu0 0.0
  %653 = vmatprep.subr.mxu0 0.0
  %654 = vmatpush2.msra.mxu0 0.0
  %655 = vmatprep.mubr.f32.mxu0 0.0
  %656 = vmatmul.mubr.f32.gmra.mxu0 %v589
  %v657 = vpop.f32.mrf.mxu0
  %v658 = vadd.f32 %v586, %v657
  %v659 = vpop.f32.mrf.mxu0
  %660 = vdwg.mxu0
  %v661 = vrot.slane %v148, 4
  %v662 = vsel %vm166, %v661, 0
  %664 = vmatprep.subr.mxu0 0.0
  %665 = vmatpush1.msra.mxu0 0.0
  %666 = vmatprep.subr.mxu0 0.0
  %667 = vmatpush1.msra.mxu0 0.0
  %668 = vmatprep.subr.mxu0 0.0
  %669 = vmatpush1.msra.mxu0 0.0
  %670 = vmatprep.subr.mxu0 0.0
  %671 = vmatpush1.msra.mxu0 0.0
  %672 = vmatprep.subr.mxu0 0.0
  %673 = vmatpush1.msra.mxu0 0.0
  %674 = vmatprep.subr.mxu0 0.0
  %675 = vmatpush1.msra.mxu0 0.0
  %676 = vmatprep.subr.mxu0 0.0
  %677 = vmatpush1.msra.mxu0 0.0
  %678 = vmatprep.subr.mxu0 0.0
  %679 = vmatpush1.msra.mxu0 0.0
  %680 = vmatprep.subr.mxu0 0.0
  %681 = vmatpush1.msra.mxu0 %v410
  %682 = vmatprep.subr.mxu0 0.0
  %683 = vmatpush1.msra.mxu0 %v409
  %684 = vmatprep.subr.mxu0 0.0
  %685 = vmatpush1.msra.mxu0 %v408
  %686 = vmatprep.subr.mxu0 0.0
  %687 = vmatpush1.msra.mxu0 %v407
  %688 = vmatprep.subr.mxu0 0.0
  %689 = vmatpush1.msra.mxu0 %v406
  %690 = vmatprep.subr.mxu0 0.0
  %691 = vmatpush1.msra.mxu0 %v405
  %692 = vmatprep.subr.mxu0 0.0
  %693 = vmatpush1.msra.mxu0 %v404
  %694 = vmatprep.subr.mxu0 0.0
  %695 = vmatpush1.msra.mxu0 %v403
  %696 = vmatprep.subr.mxu0 0.0
  %697 = vmatpush2.msra.mxu0 0.0
  %698 = vmatprep.subr.mxu0 0.0
  %699 = vmatpush2.msra.mxu0 0.0
  %700 = vmatprep.subr.mxu0 0.0
  %701 = vmatpush2.msra.mxu0 0.0
  %702 = vmatprep.subr.mxu0 0.0
  %703 = vmatpush2.msra.mxu0 0.0
  %704 = vmatprep.subr.mxu0 0.0
  %705 = vmatpush2.msra.mxu0 0.0
  %706 = vmatprep.subr.mxu0 0.0
  %707 = vmatpush2.msra.mxu0 0.0
  %708 = vmatprep.subr.mxu0 0.0
  %709 = vmatpush2.msra.mxu0 0.0
  %710 = vmatprep.subr.mxu0 0.0
  %711 = vmatpush2.msra.mxu0 0.0
  %712 = vmatprep.subr.mxu0 0.0
  %713 = vmatpush2.msra.mxu0 0.0
  %714 = vmatprep.subr.mxu0 0.0
  %715 = vmatpush2.msra.mxu0 0.0
  %716 = vmatprep.subr.mxu0 0.0
  %717 = vmatpush2.msra.mxu0 0.0
  %718 = vmatprep.subr.mxu0 0.0
  %719 = vmatpush2.msra.mxu0 0.0
  %720 = vmatprep.subr.mxu0 0.0
  %721 = vmatpush2.msra.mxu0 0.0
  %722 = vmatprep.subr.mxu0 0.0
  %723 = vmatpush2.msra.mxu0 0.0
  %724 = vmatprep.subr.mxu0 0.0
  %725 = vmatpush2.msra.mxu0 0.0
  %726 = vmatprep.subr.mxu0 0.0
  %727 = vmatpush2.msra.mxu0 0.0
  %728 = vmatprep.mubr.f32.mxu0 0.0
  %729 = vmatmul.mubr.f32.gmra.mxu0 %v662
  %v730 = vpop.f32.mrf.mxu0
  %v731 = vadd.f32 0.0, %v730
  %v732 = vpop.f32.mrf.mxu0
  %733 = vdwg.mxu0
  %v734 = vadd.f32 %v658, %v731
  %v735 = vrot.slane %v148, 6
  %v736 = vsel %vm166, %v735, 0
  %738 = vmatprep.subr.mxu0 0.0
  %739 = vmatpush1.msra.mxu0 0.0
  %740 = vmatprep.subr.mxu0 0.0
  %741 = vmatpush1.msra.mxu0 0.0
  %742 = vmatprep.subr.mxu0 0.0
  %743 = vmatpush1.msra.mxu0 0.0
  %744 = vmatprep.subr.mxu0 0.0
  %745 = vmatpush1.msra.mxu0 0.0
  %746 = vmatprep.subr.mxu0 0.0
  %747 = vmatpush1.msra.mxu0 0.0
  %748 = vmatprep.subr.mxu0 0.0
  %749 = vmatpush1.msra.mxu0 0.0
  %750 = vmatprep.subr.mxu0 0.0
  %751 = vmatpush1.msra.mxu0 0.0
  %752 = vmatprep.subr.mxu0 0.0
  %753 = vmatpush1.msra.mxu0 0.0
  %754 = vmatprep.subr.mxu0 0.0
  %755 = vmatpush1.msra.mxu0 %v418
  %756 = vmatprep.subr.mxu0 0.0
  %757 = vmatpush1.msra.mxu0 %v417
  %758 = vmatprep.subr.mxu0 0.0
  %759 = vmatpush1.msra.mxu0 %v416
  %760 = vmatprep.subr.mxu0 0.0
  %761 = vmatpush1.msra.mxu0 %v415
  %762 = vmatprep.subr.mxu0 0.0
  %763 = vmatpush1.msra.mxu0 %v414
  %764 = vmatprep.subr.mxu0 0.0
  %765 = vmatpush1.msra.mxu0 %v413
  %766 = vmatprep.subr.mxu0 0.0
  %767 = vmatpush1.msra.mxu0 %v412
  %768 = vmatprep.subr.mxu0 0.0
  %769 = vmatpush1.msra.mxu0 %v411
  %770 = vmatprep.subr.mxu0 0.0
  %771 = vmatpush2.msra.mxu0 0.0
  %772 = vmatprep.subr.mxu0 0.0
  %773 = vmatpush2.msra.mxu0 0.0
  %774 = vmatprep.subr.mxu0 0.0
  %775 = vmatpush2.msra.mxu0 0.0
  %776 = vmatprep.subr.mxu0 0.0
  %777 = vmatpush2.msra.mxu0 0.0
  %778 = vmatprep.subr.mxu0 0.0
  %779 = vmatpush2.msra.mxu0 0.0
  %780 = vmatprep.subr.mxu0 0.0
  %781 = vmatpush2.msra.mxu0 0.0
  %782 = vmatprep.subr.mxu0 0.0
  %783 = vmatpush2.msra.mxu0 0.0
  %784 = vmatprep.subr.mxu0 0.0
  %785 = vmatpush2.msra.mxu0 0.0
  %786 = vmatprep.subr.mxu0 0.0
  %787 = vmatpush2.msra.mxu0 0.0
  %788 = vmatprep.subr.mxu0 0.0
  %789 = vmatpush2.msra.mxu0 0.0
  %790 = vmatprep.subr.mxu0 0.0
  %791 = vmatpush2.msra.mxu0 0.0
  %792 = vmatprep.subr.mxu0 0.0
  %793 = vmatpush2.msra.mxu0 0.0
  %794 = vmatprep.subr.mxu0 0.0
  %795 = vmatpush2.msra.mxu0 0.0
  %796 = vmatprep.subr.mxu0 0.0
  %797 = vmatpush2.msra.mxu0 0.0
  %798 = vmatprep.subr.mxu0 0.0
  %799 = vmatpush2.msra.mxu0 0.0
  %800 = vmatprep.subr.mxu0 0.0
  %801 = vmatpush2.msra.mxu0 0.0
  %802 = vmatprep.mubr.f32.mxu0 0.0
  %803 = vmatmul.mubr.f32.gmra.mxu0 %v736
  %v804 = vpop.f32.mrf.mxu0
  %v805 = vadd.f32 0.0, %v804
  %v806 = vpop.f32.mrf.mxu0
  %807 = vdwg.mxu0
  %v808 = vadd.f32 %v734, %v805
  %v810 = vsel %vm166, %v153, 0
  %812 = vmatprep.subr.mxu0 0.0
  %813 = vmatpush1.msra.mxu0 0.0
  %814 = vmatprep.subr.mxu0 0.0
  %815 = vmatpush1.msra.mxu0 0.0
  %816 = vmatprep.subr.mxu0 0.0
  %817 = vmatpush1.msra.mxu0 0.0
  %818 = vmatprep.subr.mxu0 0.0
  %819 = vmatpush1.msra.mxu0 0.0
  %820 = vmatprep.subr.mxu0 0.0
  %821 = vmatpush1.msra.mxu0 0.0
  %822 = vmatprep.subr.mxu0 0.0
  %823 = vmatpush1.msra.mxu0 0.0
  %824 = vmatprep.subr.mxu0 0.0
  %825 = vmatpush1.msra.mxu0 0.0
  %826 = vmatprep.subr.mxu0 0.0
  %827 = vmatpush1.msra.mxu0 0.0
  %828 = vmatprep.subr.mxu0 0.0
  %829 = vmatpush1.msra.mxu0 %v426
  %830 = vmatprep.subr.mxu0 0.0
  %831 = vmatpush1.msra.mxu0 %v425
  %832 = vmatprep.subr.mxu0 0.0
  %833 = vmatpush1.msra.mxu0 %v424
  %834 = vmatprep.subr.mxu0 0.0
  %835 = vmatpush1.msra.mxu0 %v423
  %836 = vmatprep.subr.mxu0 0.0
  %837 = vmatpush1.msra.mxu0 %v422
  %838 = vmatprep.subr.mxu0 0.0
  %839 = vmatpush1.msra.mxu0 %v421
  %840 = vmatprep.subr.mxu0 0.0
  %841 = vmatpush1.msra.mxu0 %v420
  %842 = vmatprep.subr.mxu0 0.0
  %843 = vmatpush1.msra.mxu0 %v419
  %844 = vmatprep.subr.mxu0 0.0
  %845 = vmatpush2.msra.mxu0 0.0
  %846 = vmatprep.subr.mxu0 0.0
  %847 = vmatpush2.msra.mxu0 0.0
  %848 = vmatprep.subr.mxu0 0.0
  %849 = vmatpush2.msra.mxu0 0.0
  %850 = vmatprep.subr.mxu0 0.0
  %851 = vmatpush2.msra.mxu0 0.0
  %852 = vmatprep.subr.mxu0 0.0
  %853 = vmatpush2.msra.mxu0 0.0
  %854 = vmatprep.subr.mxu0 0.0
  %855 = vmatpush2.msra.mxu0 0.0
  %856 = vmatprep.subr.mxu0 0.0
  %857 = vmatpush2.msra.mxu0 0.0
  %858 = vmatprep.subr.mxu0 0.0
  %859 = vmatpush2.msra.mxu0 0.0
  %860 = vmatprep.subr.mxu0 0.0
  %861 = vmatpush2.msra.mxu0 0.0
  %862 = vmatprep.subr.mxu0 0.0
  %863 = vmatpush2.msra.mxu0 0.0
  %864 = vmatprep.subr.mxu0 0.0
  %865 = vmatpush2.msra.mxu0 0.0
  %866 = vmatprep.subr.mxu0 0.0
  %867 = vmatpush2.msra.mxu0 0.0
  %868 = vmatprep.subr.mxu0 0.0
  %869 = vmatpush2.msra.mxu0 0.0
  %870 = vmatprep.subr.mxu0 0.0
  %871 = vmatpush2.msra.mxu0 0.0
  %872 = vmatprep.subr.mxu0 0.0
  %873 = vmatpush2.msra.mxu0 0.0
  %874 = vmatprep.subr.mxu0 0.0
  %875 = vmatpush2.msra.mxu0 0.0
  %876 = vmatprep.mubr.f32.mxu0 0.0
  %877 = vmatmul.mubr.f32.gmra.mxu0 %v810
  %v878 = vpop.f32.mrf.mxu0
  %v879 = vadd.f32 0.0, %v878
  %v880 = vpop.f32.mrf.mxu0
  %881 = vdwg.mxu0
  %v882 = vadd.f32 %v808, %v879
  %v883 = vrot.slane %v153, 2
  %v884 = vsel %vm166, %v883, 0
  %886 = vmatprep.subr.mxu0 0.0
  %887 = vmatpush1.msra.mxu0 0.0
  %888 = vmatprep.subr.mxu0 0.0
  %889 = vmatpush1.msra.mxu0 0.0
  %890 = vmatprep.subr.mxu0 0.0
  %891 = vmatpush1.msra.mxu0 0.0
  %892 = vmatprep.subr.mxu0 0.0
  %893 = vmatpush1.msra.mxu0 0.0
  %894 = vmatprep.subr.mxu0 0.0
  %895 = vmatpush1.msra.mxu0 0.0
  %896 = vmatprep.subr.mxu0 0.0
  %897 = vmatpush1.msra.mxu0 0.0
  %898 = vmatprep.subr.mxu0 0.0
  %899 = vmatpush1.msra.mxu0 0.0
  %900 = vmatprep.subr.mxu0 0.0
  %901 = vmatpush1.msra.mxu0 0.0
  %902 = vmatprep.subr.mxu0 0.0
  %903 = vmatpush1.msra.mxu0 %v434
  %904 = vmatprep.subr.mxu0 0.0
  %905 = vmatpush1.msra.mxu0 %v433
  %906 = vmatprep.subr.mxu0 0.0
  %907 = vmatpush1.msra.mxu0 %v432
  %908 = vmatprep.subr.mxu0 0.0
  %909 = vmatpush1.msra.mxu0 %v431
  %910 = vmatprep.subr.mxu0 0.0
  %911 = vmatpush1.msra.mxu0 %v430
  %912 = vmatprep.subr.mxu0 0.0
  %913 = vmatpush1.msra.mxu0 %v429
  %914 = vmatprep.subr.mxu0 0.0
  %915 = vmatpush1.msra.mxu0 %v428
  %916 = vmatprep.subr.mxu0 0.0
  %917 = vmatpush1.msra.mxu0 %v427
  %918 = vmatprep.subr.mxu0 0.0
  %919 = vmatpush2.msra.mxu0 0.0
  %920 = vmatprep.subr.mxu0 0.0
  %921 = vmatpush2.msra.mxu0 0.0
  %922 = vmatprep.subr.mxu0 0.0
  %923 = vmatpush2.msra.mxu0 0.0
  %924 = vmatprep.subr.mxu0 0.0
  %925 = vmatpush2.msra.mxu0 0.0
  %926 = vmatprep.subr.mxu0 0.0
  %927 = vmatpush2.msra.mxu0 0.0
  %928 = vmatprep.subr.mxu0 0.0
  %929 = vmatpush2.msra.mxu0 0.0
  %930 = vmatprep.subr.mxu0 0.0
  %931 = vmatpush2.msra.mxu0 0.0
  %932 = vmatprep.subr.mxu0 0.0
  %933 = vmatpush2.msra.mxu0 0.0
  %934 = vmatprep.subr.mxu0 0.0
  %935 = vmatpush2.msra.mxu0 0.0
  %936 = vmatprep.subr.mxu0 0.0
  %937 = vmatpush2.msra.mxu0 0.0
  %938 = vmatprep.subr.mxu0 0.0
  %939 = vmatpush2.msra.mxu0 0.0
  %940 = vmatprep.subr.mxu0 0.0
  %941 = vmatpush2.msra.mxu0 0.0
  %942 = vmatprep.subr.mxu0 0.0
  %943 = vmatpush2.msra.mxu0 0.0
  %944 = vmatprep.subr.mxu0 0.0
  %945 = vmatpush2.msra.mxu0 0.0
  %946 = vmatprep.subr.mxu0 0.0
  %947 = vmatpush2.msra.mxu0 0.0
  %948 = vmatprep.subr.mxu0 0.0
  %949 = vmatpush2.msra.mxu0 0.0
  %950 = vmatprep.mubr.f32.mxu0 0.0
  %951 = vmatmul.mubr.f32.gmra.mxu0 %v884
  %v952 = vpop.f32.mrf.mxu0
  %v953 = vadd.f32 0.0, %v952
  %v954 = vpop.f32.mrf.mxu0
  %955 = vdwg.mxu0
  %v956 = vadd.f32 %v882, %v953
  %v957 = vrot.slane %v153, 4
  %v958 = vsel %vm166, %v957, 0
  %960 = vmatprep.subr.mxu0 0.0
  %961 = vmatpush1.msra.mxu0 0.0
  %962 = vmatprep.subr.mxu0 0.0
  %963 = vmatpush1.msra.mxu0 0.0
  %964 = vmatprep.subr.mxu0 0.0
  %965 = vmatpush1.msra.mxu0 0.0
  %966 = vmatprep.subr.mxu0 0.0
  %967 = vmatpush1.msra.mxu0 0.0
  %968 = vmatprep.subr.mxu0 0.0
  %969 = vmatpush1.msra.mxu0 0.0
  %970 = vmatprep.subr.mxu0 0.0
  %971 = vmatpush1.msra.mxu0 0.0
  %972 = vmatprep.subr.mxu0 0.0
  %973 = vmatpush1.msra.mxu0 0.0
  %974 = vmatprep.subr.mxu0 0.0
  %975 = vmatpush1.msra.mxu0 0.0
  %976 = vmatprep.subr.mxu0 0.0
  %977 = vmatpush1.msra.mxu0 %v442
  %978 = vmatprep.subr.mxu0 0.0
  %979 = vmatpush1.msra.mxu0 %v441
  %980 = vmatprep.subr.mxu0 0.0
  %981 = vmatpush1.msra.mxu0 %v440
  %982 = vmatprep.subr.mxu0 0.0
  %983 = vmatpush1.msra.mxu0 %v439
  %984 = vmatprep.subr.mxu0 0.0
  %985 = vmatpush1.msra.mxu0 %v438
  %986 = vmatprep.subr.mxu0 0.0
  %987 = vmatpush1.msra.mxu0 %v437
  %988 = vmatprep.subr.mxu0 0.0
  %989 = vmatpush1.msra.mxu0 %v436
  %990 = vmatprep.subr.mxu0 0.0
  %991 = vmatpush1.msra.mxu0 %v435
  %992 = vmatprep.subr.mxu0 0.0
  %993 = vmatpush2.msra.mxu0 0.0
  %994 = vmatprep.subr.mxu0 0.0
  %995 = vmatpush2.msra.mxu0 0.0
  %996 = vmatprep.subr.mxu0 0.0
  %997 = vmatpush2.msra.mxu0 0.0
  %998 = vmatprep.subr.mxu0 0.0
  %999 = vmatpush2.msra.mxu0 0.0
  %1000 = vmatprep.subr.mxu0 0.0
  %1001 = vmatpush2.msra.mxu0 0.0
  %1002 = vmatprep.subr.mxu0 0.0
  %1003 = vmatpush2.msra.mxu0 0.0
  %1004 = vmatprep.subr.mxu0 0.0
  %1005 = vmatpush2.msra.mxu0 0.0
  %1006 = vmatprep.subr.mxu0 0.0
  %1007 = vmatpush2.msra.mxu0 0.0
  %1008 = vmatprep.subr.mxu0 0.0
  %1009 = vmatpush2.msra.mxu0 0.0
  %1010 = vmatprep.subr.mxu0 0.0
  %1011 = vmatpush2.msra.mxu0 0.0
  %1012 = vmatprep.subr.mxu0 0.0
  %1013 = vmatpush2.msra.mxu0 0.0
  %1014 = vmatprep.subr.mxu0 0.0
  %1015 = vmatpush2.msra.mxu0 0.0
  %1016 = vmatprep.subr.mxu0 0.0
  %1017 = vmatpush2.msra.mxu0 0.0
  %1018 = vmatprep.subr.mxu0 0.0
  %1019 = vmatpush2.msra.mxu0 0.0
  %1020 = vmatprep.subr.mxu0 0.0
  %1021 = vmatpush2.msra.mxu0 0.0
  %1022 = vmatprep.subr.mxu0 0.0
  %1023 = vmatpush2.msra.mxu0 0.0
  %1024 = vmatprep.mubr.f32.mxu0 0.0
  %1025 = vmatmul.mubr.f32.gmra.mxu0 %v958
  %v1026 = vpop.f32.mrf.mxu0
  %v1027 = vadd.f32 0.0, %v1026
  %v1028 = vpop.f32.mrf.mxu0
  %1029 = vdwg.mxu0
  %v1030 = vadd.f32 %v956, %v1027
  %v1031 = vrot.slane %v153, 6
  %v1032 = vsel %vm166, %v1031, 0
  %1034 = vmatprep.subr.mxu0 0.0
  %1035 = vmatpush1.msra.mxu0 0.0
  %1036 = vmatprep.subr.mxu0 0.0
  %1037 = vmatpush1.msra.mxu0 0.0
  %1038 = vmatprep.subr.mxu0 0.0
  %1039 = vmatpush1.msra.mxu0 0.0
  %1040 = vmatprep.subr.mxu0 0.0
  %1041 = vmatpush1.msra.mxu0 0.0
  %1042 = vmatprep.subr.mxu0 0.0
  %1043 = vmatpush1.msra.mxu0 0.0
  %1044 = vmatprep.subr.mxu0 0.0
  %1045 = vmatpush1.msra.mxu0 0.0
  %1046 = vmatprep.subr.mxu0 0.0
  %1047 = vmatpush1.msra.mxu0 0.0
  %1048 = vmatprep.subr.mxu0 0.0
  %1049 = vmatpush1.msra.mxu0 0.0
  %1050 = vmatprep.subr.mxu0 0.0
  %1051 = vmatpush1.msra.mxu0 %v450
  %1052 = vmatprep.subr.mxu0 0.0
  %1053 = vmatpush1.msra.mxu0 %v449
  %1054 = vmatprep.subr.mxu0 0.0
  %1055 = vmatpush1.msra.mxu0 %v448
  %1056 = vmatprep.subr.mxu0 0.0
  %1057 = vmatpush1.msra.mxu0 %v447
  %1058 = vmatprep.subr.mxu0 0.0
  %1059 = vmatpush1.msra.mxu0 %v446
  %1060 = vmatprep.subr.mxu0 0.0
  %1061 = vmatpush1.msra.mxu0 %v445
  %1062 = vmatprep.subr.mxu0 0.0
  %1063 = vmatpush1.msra.mxu0 %v444
  %1064 = vmatprep.subr.mxu0 0.0
  %1065 = vmatpush1.msra.mxu0 %v443
  %1066 = vmatprep.subr.mxu0 0.0
  %1067 = vmatpush2.msra.mxu0 0.0
  %1068 = vmatprep.subr.mxu0 0.0
  %1069 = vmatpush2.msra.mxu0 0.0
  %1070 = vmatprep.subr.mxu0 0.0
  %1071 = vmatpush2.msra.mxu0 0.0
  %1072 = vmatprep.subr.mxu0 0.0
  %1073 = vmatpush2.msra.mxu0 0.0
  %1074 = vmatprep.subr.mxu0 0.0
  %1075 = vmatpush2.msra.mxu0 0.0
  %1076 = vmatprep.subr.mxu0 0.0
  %1077 = vmatpush2.msra.mxu0 0.0
  %1078 = vmatprep.subr.mxu0 0.0
  %1079 = vmatpush2.msra.mxu0 0.0
  %1080 = vmatprep.subr.mxu0 0.0
  %1081 = vmatpush2.msra.mxu0 0.0
  %1082 = vmatprep.subr.mxu0 0.0
  %1083 = vmatpush2.msra.mxu0 0.0
  %1084 = vmatprep.subr.mxu0 0.0
  %1085 = vmatpush2.msra.mxu0 0.0
  %1086 = vmatprep.subr.mxu0 0.0
  %1087 = vmatpush2.msra.mxu0 0.0
  %1088 = vmatprep.subr.mxu0 0.0
  %1089 = vmatpush2.msra.mxu0 0.0
  %1090 = vmatprep.subr.mxu0 0.0
  %1091 = vmatpush2.msra.mxu0 0.0
  %1092 = vmatprep.subr.mxu0 0.0
  %1093 = vmatpush2.msra.mxu0 0.0
  %1094 = vmatprep.subr.mxu0 0.0
  %1095 = vmatpush2.msra.mxu0 0.0
  %1096 = vmatprep.subr.mxu0 0.0
  %1097 = vmatpush2.msra.mxu0 0.0
  %1098 = vmatprep.mubr.f32.mxu0 0.0
  %1099 = vmatmul.mubr.f32.gmra.mxu0 %v1032
  %v1100 = vpop.f32.mrf.mxu0
  %v1101 = vadd.f32 0.0, %v1100
  %v1102 = vpop.f32.mrf.mxu0
  %1103 = vdwg.mxu0
  %v1104 = vadd.f32 %v1030, %v1101
  %v1106 = vsel %vm166, %v158, 0
  %1108 = vmatprep.subr.mxu0 0.0
  %1109 = vmatpush1.msra.mxu0 0.0
  %1110 = vmatprep.subr.mxu0 0.0
  %1111 = vmatpush1.msra.mxu0 0.0
  %1112 = vmatprep.subr.mxu0 0.0
  %1113 = vmatpush1.msra.mxu0 0.0
  %1114 = vmatprep.subr.mxu0 0.0
  %1115 = vmatpush1.msra.mxu0 0.0
  %1116 = vmatprep.subr.mxu0 0.0
  %1117 = vmatpush1.msra.mxu0 0.0
  %1118 = vmatprep.subr.mxu0 0.0
  %1119 = vmatpush1.msra.mxu0 0.0
  %1120 = vmatprep.subr.mxu0 0.0
  %1121 = vmatpush1.msra.mxu0 0.0
  %1122 = vmatprep.subr.mxu0 0.0
  %1123 = vmatpush1.msra.mxu0 0.0
  %1124 = vmatprep.subr.mxu0 0.0
  %1125 = vmatpush1.msra.mxu0 %v458
  %1126 = vmatprep.subr.mxu0 0.0
  %1127 = vmatpush1.msra.mxu0 %v457
  %1128 = vmatprep.subr.mxu0 0.0
  %1129 = vmatpush1.msra.mxu0 %v456
  %1130 = vmatprep.subr.mxu0 0.0
  %1131 = vmatpush1.msra.mxu0 %v455
  %1132 = vmatprep.subr.mxu0 0.0
  %1133 = vmatpush1.msra.mxu0 %v454
  %1134 = vmatprep.subr.mxu0 0.0
  %1135 = vmatpush1.msra.mxu0 %v453
  %1136 = vmatprep.subr.mxu0 0.0
  %1137 = vmatpush1.msra.mxu0 %v452
  %1138 = vmatprep.subr.mxu0 0.0
  %1139 = vmatpush1.msra.mxu0 %v451
  %1140 = vmatprep.subr.mxu0 0.0
  %1141 = vmatpush2.msra.mxu0 0.0
  %1142 = vmatprep.subr.mxu0 0.0
  %1143 = vmatpush2.msra.mxu0 0.0
  %1144 = vmatprep.subr.mxu0 0.0
  %1145 = vmatpush2.msra.mxu0 0.0
  %1146 = vmatprep.subr.mxu0 0.0
  %1147 = vmatpush2.msra.mxu0 0.0
  %1148 = vmatprep.subr.mxu0 0.0
  %1149 = vmatpush2.msra.mxu0 0.0
  %1150 = vmatprep.subr.mxu0 0.0
  %1151 = vmatpush2.msra.mxu0 0.0
  %1152 = vmatprep.subr.mxu0 0.0
  %1153 = vmatpush2.msra.mxu0 0.0
  %1154 = vmatprep.subr.mxu0 0.0
  %1155 = vmatpush2.msra.mxu0 0.0
  %1156 = vmatprep.subr.mxu0 0.0
  %1157 = vmatpush2.msra.mxu0 0.0
  %1158 = vmatprep.subr.mxu0 0.0
  %1159 = vmatpush2.msra.mxu0 0.0
  %1160 = vmatprep.subr.mxu0 0.0
  %1161 = vmatpush2.msra.mxu0 0.0
  %1162 = vmatprep.subr.mxu0 0.0
  %1163 = vmatpush2.msra.mxu0 0.0
  %1164 = vmatprep.subr.mxu0 0.0
  %1165 = vmatpush2.msra.mxu0 0.0
  %1166 = vmatprep.subr.mxu0 0.0
  %1167 = vmatpush2.msra.mxu0 0.0
  %1168 = vmatprep.subr.mxu0 0.0
  %1169 = vmatpush2.msra.mxu0 0.0
  %1170 = vmatprep.subr.mxu0 0.0
  %1171 = vmatpush2.msra.mxu0 0.0
  %1172 = vmatprep.mubr.f32.mxu0 0.0
  %1173 = vmatmul.mubr.f32.gmra.mxu0 %v1106
  %v1174 = vpop.f32.mrf.mxu0
  %v1175 = vadd.f32 0.0, %v1174
  %v1176 = vpop.f32.mrf.mxu0
  %1177 = vdwg.mxu0
  %v1178 = vadd.f32 %v1104, %v1175
  %v1179 = vrot.slane %v158, 2
  %v1180 = vsel %vm166, %v1179, 0
  %1182 = vmatprep.subr.mxu0 0.0
  %1183 = vmatpush1.msra.mxu0 0.0
  %1184 = vmatprep.subr.mxu0 0.0
  %1185 = vmatpush1.msra.mxu0 0.0
  %1186 = vmatprep.subr.mxu0 0.0
  %1187 = vmatpush1.msra.mxu0 0.0
  %1188 = vmatprep.subr.mxu0 0.0
  %1189 = vmatpush1.msra.mxu0 0.0
  %1190 = vmatprep.subr.mxu0 0.0
  %1191 = vmatpush1.msra.mxu0 0.0
  %1192 = vmatprep.subr.mxu0 0.0
  %1193 = vmatpush1.msra.mxu0 0.0
  %1194 = vmatprep.subr.mxu0 0.0
  %1195 = vmatpush1.msra.mxu0 0.0
  %1196 = vmatprep.subr.mxu0 0.0
  %1197 = vmatpush1.msra.mxu0 0.0
  %1198 = vmatprep.subr.mxu0 0.0
  %1199 = vmatpush1.msra.mxu0 %v466
  %1200 = vmatprep.subr.mxu0 0.0
  %1201 = vmatpush1.msra.mxu0 %v465
  %1202 = vmatprep.subr.mxu0 0.0
  %1203 = vmatpush1.msra.mxu0 %v464
  %1204 = vmatprep.subr.mxu0 0.0
  %1205 = vmatpush1.msra.mxu0 %v463
  %1206 = vmatprep.subr.mxu0 0.0
  %1207 = vmatpush1.msra.mxu0 %v462
  %1208 = vmatprep.subr.mxu0 0.0
  %1209 = vmatpush1.msra.mxu0 %v461
  %1210 = vmatprep.subr.mxu0 0.0
  %1211 = vmatpush1.msra.mxu0 %v460
  %1212 = vmatprep.subr.mxu0 0.0
  %1213 = vmatpush1.msra.mxu0 %v459
  %1214 = vmatprep.subr.mxu0 0.0
  %1215 = vmatpush2.msra.mxu0 0.0
  %1216 = vmatprep.subr.mxu0 0.0
  %1217 = vmatpush2.msra.mxu0 0.0
  %1218 = vmatprep.subr.mxu0 0.0
  %1219 = vmatpush2.msra.mxu0 0.0
  %1220 = vmatprep.subr.mxu0 0.0
  %1221 = vmatpush2.msra.mxu0 0.0
  %1222 = vmatprep.subr.mxu0 0.0
  %1223 = vmatpush2.msra.mxu0 0.0
  %1224 = vmatprep.subr.mxu0 0.0
  %1225 = vmatpush2.msra.mxu0 0.0
  %1226 = vmatprep.subr.mxu0 0.0
  %1227 = vmatpush2.msra.mxu0 0.0
  %1228 = vmatprep.subr.mxu0 0.0
  %1229 = vmatpush2.msra.mxu0 0.0
  %1230 = vmatprep.subr.mxu0 0.0
  %1231 = vmatpush2.msra.mxu0 0.0
  %1232 = vmatprep.subr.mxu0 0.0
  %1233 = vmatpush2.msra.mxu0 0.0
  %1234 = vmatprep.subr.mxu0 0.0
  %1235 = vmatpush2.msra.mxu0 0.0
  %1236 = vmatprep.subr.mxu0 0.0
  %1237 = vmatpush2.msra.mxu0 0.0
  %1238 = vmatprep.subr.mxu0 0.0
  %1239 = vmatpush2.msra.mxu0 0.0
  %1240 = vmatprep.subr.mxu0 0.0
  %1241 = vmatpush2.msra.mxu0 0.0
  %1242 = vmatprep.subr.mxu0 0.0
  %1243 = vmatpush2.msra.mxu0 0.0
  %1244 = vmatprep.subr.mxu0 0.0
  %1245 = vmatpush2.msra.mxu0 0.0
  %1246 = vmatprep.mubr.f32.mxu0 0.0
  %1247 = vmatmul.mubr.f32.gmra.mxu0 %v1180
  %v1248 = vpop.f32.mrf.mxu0
  %v1249 = vadd.f32 0.0, %v1248
  %v1250 = vpop.f32.mrf.mxu0
  %1251 = vdwg.mxu0
  %v1252 = vadd.f32 %v1178, %v1249
  %v1253 = vrot.slane %v158, 4
  %v1254 = vsel %vm166, %v1253, 0
  %1256 = vmatprep.subr.mxu0 0.0
  %1257 = vmatpush1.msra.mxu0 0.0
  %1258 = vmatprep.subr.mxu0 0.0
  %1259 = vmatpush1.msra.mxu0 0.0
  %1260 = vmatprep.subr.mxu0 0.0
  %1261 = vmatpush1.msra.mxu0 0.0
  %1262 = vmatprep.subr.mxu0 0.0
  %1263 = vmatpush1.msra.mxu0 0.0
  %1264 = vmatprep.subr.mxu0 0.0
  %1265 = vmatpush1.msra.mxu0 0.0
  %1266 = vmatprep.subr.mxu0 0.0
  %1267 = vmatpush1.msra.mxu0 0.0
  %1268 = vmatprep.subr.mxu0 0.0
  %1269 = vmatpush1.msra.mxu0 0.0
  %1270 = vmatprep.subr.mxu0 0.0
  %1271 = vmatpush1.msra.mxu0 0.0
  %1272 = vmatprep.subr.mxu0 0.0
  %1273 = vmatpush1.msra.mxu0 %v474
  %1274 = vmatprep.subr.mxu0 0.0
  %1275 = vmatpush1.msra.mxu0 %v473
  %1276 = vmatprep.subr.mxu0 0.0
  %1277 = vmatpush1.msra.mxu0 %v472
  %1278 = vmatprep.subr.mxu0 0.0
  %1279 = vmatpush1.msra.mxu0 %v471
  %1280 = vmatprep.subr.mxu0 0.0
  %1281 = vmatpush1.msra.mxu0 %v470
  %1282 = vmatprep.subr.mxu0 0.0
  %1283 = vmatpush1.msra.mxu0 %v469
  %1284 = vmatprep.subr.mxu0 0.0
  %1285 = vmatpush1.msra.mxu0 %v468
  %1286 = vmatprep.subr.mxu0 0.0
  %1287 = vmatpush1.msra.mxu0 %v467
  %1288 = vmatprep.subr.mxu0 0.0
  %1289 = vmatpush2.msra.mxu0 0.0
  %1290 = vmatprep.subr.mxu0 0.0
  %1291 = vmatpush2.msra.mxu0 0.0
  %1292 = vmatprep.subr.mxu0 0.0
  %1293 = vmatpush2.msra.mxu0 0.0
  %1294 = vmatprep.subr.mxu0 0.0
  %1295 = vmatpush2.msra.mxu0 0.0
  %1296 = vmatprep.subr.mxu0 0.0
  %1297 = vmatpush2.msra.mxu0 0.0
  %1298 = vmatprep.subr.mxu0 0.0
  %1299 = vmatpush2.msra.mxu0 0.0
  %1300 = vmatprep.subr.mxu0 0.0
  %1301 = vmatpush2.msra.mxu0 0.0
  %1302 = vmatprep.subr.mxu0 0.0
  %1303 = vmatpush2.msra.mxu0 0.0
  %1304 = vmatprep.subr.mxu0 0.0
  %1305 = vmatpush2.msra.mxu0 0.0
  %1306 = vmatprep.subr.mxu0 0.0
  %1307 = vmatpush2.msra.mxu0 0.0
  %1308 = vmatprep.subr.mxu0 0.0
  %1309 = vmatpush2.msra.mxu0 0.0
  %1310 = vmatprep.subr.mxu0 0.0
  %1311 = vmatpush2.msra.mxu0 0.0
  %1312 = vmatprep.subr.mxu0 0.0
  %1313 = vmatpush2.msra.mxu0 0.0
  %1314 = vmatprep.subr.mxu0 0.0
  %1315 = vmatpush2.msra.mxu0 0.0
  %1316 = vmatprep.subr.mxu0 0.0
  %1317 = vmatpush2.msra.mxu0 0.0
  %1318 = vmatprep.subr.mxu0 0.0
  %1319 = vmatpush2.msra.mxu0 0.0
  %1320 = vmatprep.mubr.f32.mxu0 0.0
  %1321 = vmatmul.mubr.f32.gmra.mxu0 %v1254
  %v1322 = vpop.f32.mrf.mxu0
  %v1323 = vadd.f32 0.0, %v1322
  %v1324 = vpop.f32.mrf.mxu0
  %1325 = vdwg.mxu0
  %v1326 = vadd.f32 %v1252, %v1323
  %v1327 = vrot.slane %v158, 6
  %v1328 = vsel %vm166, %v1327, 0
  %1330 = vmatprep.subr.mxu0 0.0
  %1331 = vmatpush1.msra.mxu0 0.0
  %1332 = vmatprep.subr.mxu0 0.0
  %1333 = vmatpush1.msra.mxu0 0.0
  %1334 = vmatprep.subr.mxu0 0.0
  %1335 = vmatpush1.msra.mxu0 0.0
  %1336 = vmatprep.subr.mxu0 0.0
  %1337 = vmatpush1.msra.mxu0 0.0
  %1338 = vmatprep.subr.mxu0 0.0
  %1339 = vmatpush1.msra.mxu0 0.0
  %1340 = vmatprep.subr.mxu0 0.0
  %1341 = vmatpush1.msra.mxu0 0.0
  %1342 = vmatprep.subr.mxu0 0.0
  %1343 = vmatpush1.msra.mxu0 0.0
  %1344 = vmatprep.subr.mxu0 0.0
  %1345 = vmatpush1.msra.mxu0 0.0
  %1346 = vmatprep.subr.mxu0 0.0
  %1347 = vmatpush1.msra.mxu0 %v482
  %1348 = vmatprep.subr.mxu0 0.0
  %1349 = vmatpush1.msra.mxu0 %v481
  %1350 = vmatprep.subr.mxu0 0.0
  %1351 = vmatpush1.msra.mxu0 %v480
  %1352 = vmatprep.subr.mxu0 0.0
  %1353 = vmatpush1.msra.mxu0 %v479
  %1354 = vmatprep.subr.mxu0 0.0
  %1355 = vmatpush1.msra.mxu0 %v478
  %1356 = vmatprep.subr.mxu0 0.0
  %1357 = vmatpush1.msra.mxu0 %v477
  %1358 = vmatprep.subr.mxu0 0.0
  %1359 = vmatpush1.msra.mxu0 %v476
  %1360 = vmatprep.subr.mxu0 0.0
  %1361 = vmatpush1.msra.mxu0 %v475
  %1362 = vmatprep.subr.mxu0 0.0
  %1363 = vmatpush2.msra.mxu0 0.0
  %1364 = vmatprep.subr.mxu0 0.0
  %1365 = vmatpush2.msra.mxu0 0.0
  %1366 = vmatprep.subr.mxu0 0.0
  %1367 = vmatpush2.msra.mxu0 0.0
  %1368 = vmatprep.subr.mxu0 0.0
  %1369 = vmatpush2.msra.mxu0 0.0
  %1370 = vmatprep.subr.mxu0 0.0
  %1371 = vmatpush2.msra.mxu0 0.0
  %1372 = vmatprep.subr.mxu0 0.0
  %1373 = vmatpush2.msra.mxu0 0.0
  %1374 = vmatprep.subr.mxu0 0.0
  %1375 = vmatpush2.msra.mxu0 0.0
  %1376 = vmatprep.subr.mxu0 0.0
  %1377 = vmatpush2.msra.mxu0 0.0
  %1378 = vmatprep.subr.mxu0 0.0
  %1379 = vmatpush2.msra.mxu0 0.0
  %1380 = vmatprep.subr.mxu0 0.0
  %1381 = vmatpush2.msra.mxu0 0.0
  %1382 = vmatprep.subr.mxu0 0.0
  %1383 = vmatpush2.msra.mxu0 0.0
  %1384 = vmatprep.subr.mxu0 0.0
  %1385 = vmatpush2.msra.mxu0 0.0
  %1386 = vmatprep.subr.mxu0 0.0
  %1387 = vmatpush2.msra.mxu0 0.0
  %1388 = vmatprep.subr.mxu0 0.0
  %1389 = vmatpush2.msra.mxu0 0.0
  %1390 = vmatprep.subr.mxu0 0.0
  %1391 = vmatpush2.msra.mxu0 0.0
  %1392 = vmatprep.subr.mxu0 0.0
  %1393 = vmatpush2.msra.mxu0 0.0
  %1394 = vmatprep.mubr.f32.mxu0 0.0
  %1395 = vmatmul.mubr.f32.gmra.mxu0 %v1328
  %v1396 = vpop.f32.mrf.mxu0
  %v1397 = vadd.f32 0.0, %v1396
  %v1398 = vpop.f32.mrf.mxu0
  %1399 = vdwg.mxu0
  %v1400 = vadd.f32 %v1326, %v1397
  %v1402 = vsel %vm166, %v163, 0
  %1404 = vmatprep.subr.mxu0 0.0
  %1405 = vmatpush1.msra.mxu0 0.0
  %1406 = vmatprep.subr.mxu0 0.0
  %1407 = vmatpush1.msra.mxu0 0.0
  %1408 = vmatprep.subr.mxu0 0.0
  %1409 = vmatpush1.msra.mxu0 0.0
  %1410 = vmatprep.subr.mxu0 0.0
  %1411 = vmatpush1.msra.mxu0 0.0
  %1412 = vmatprep.subr.mxu0 0.0
  %1413 = vmatpush1.msra.mxu0 0.0
  %1414 = vmatprep.subr.mxu0 0.0
  %1415 = vmatpush1.msra.mxu0 0.0
  %1416 = vmatprep.subr.mxu0 0.0
  %1417 = vmatpush1.msra.mxu0 0.0
  %1418 = vmatprep.subr.mxu0 0.0
  %1419 = vmatpush1.msra.mxu0 0.0
  %1420 = vmatprep.subr.mxu0 0.0
  %1421 = vmatpush1.msra.mxu0 %v490
  %1422 = vmatprep.subr.mxu0 0.0
  %1423 = vmatpush1.msra.mxu0 %v489
  %1424 = vmatprep.subr.mxu0 0.0
  %1425 = vmatpush1.msra.mxu0 %v488
  %1426 = vmatprep.subr.mxu0 0.0
  %1427 = vmatpush1.msra.mxu0 %v487
  %1428 = vmatprep.subr.mxu0 0.0
  %1429 = vmatpush1.msra.mxu0 %v486
  %1430 = vmatprep.subr.mxu0 0.0
  %1431 = vmatpush1.msra.mxu0 %v485
  %1432 = vmatprep.subr.mxu0 0.0
  %1433 = vmatpush1.msra.mxu0 %v484
  %1434 = vmatprep.subr.mxu0 0.0
  %1435 = vmatpush1.msra.mxu0 %v483
  %1436 = vmatprep.subr.mxu0 0.0
  %1437 = vmatpush2.msra.mxu0 0.0
  %1438 = vmatprep.subr.mxu0 0.0
  %1439 = vmatpush2.msra.mxu0 0.0
  %1440 = vmatprep.subr.mxu0 0.0
  %1441 = vmatpush2.msra.mxu0 0.0
  %1442 = vmatprep.subr.mxu0 0.0
  %1443 = vmatpush2.msra.mxu0 0.0
  %1444 = vmatprep.subr.mxu0 0.0
  %1445 = vmatpush2.msra.mxu0 0.0
  %1446 = vmatprep.subr.mxu0 0.0
  %1447 = vmatpush2.msra.mxu0 0.0
  %1448 = vmatprep.subr.mxu0 0.0
  %1449 = vmatpush2.msra.mxu0 0.0
  %1450 = vmatprep.subr.mxu0 0.0
  %1451 = vmatpush2.msra.mxu0 0.0
  %1452 = vmatprep.subr.mxu0 0.0
  %1453 = vmatpush2.msra.mxu0 0.0
  %1454 = vmatprep.subr.mxu0 0.0
  %1455 = vmatpush2.msra.mxu0 0.0
  %1456 = vmatprep.subr.mxu0 0.0
  %1457 = vmatpush2.msra.mxu0 0.0
  %1458 = vmatprep.subr.mxu0 0.0
  %1459 = vmatpush2.msra.mxu0 0.0
  %1460 = vmatprep.subr.mxu0 0.0
  %1461 = vmatpush2.msra.mxu0 0.0
  %1462 = vmatprep.subr.mxu0 0.0
  %1463 = vmatpush2.msra.mxu0 0.0
  %1464 = vmatprep.subr.mxu0 0.0
  %1465 = vmatpush2.msra.mxu0 0.0
  %1466 = vmatprep.subr.mxu0 0.0
  %1467 = vmatpush2.msra.mxu0 0.0
  %1468 = vmatprep.mubr.f32.mxu0 0.0
  %1469 = vmatmul.mubr.f32.gmra.mxu0 %v1402
  %v1470 = vpop.f32.mrf.mxu0
  %v1471 = vadd.f32 0.0, %v1470
  %v1472 = vpop.f32.mrf.mxu0
  %1473 = vdwg.mxu0
  %v1474 = vadd.f32 %v1400, %v1471
  %v1475 = vrot.slane %v163, 2
  %v1476 = vsel %vm166, %v1475, 0
  %1478 = vmatprep.subr.mxu0 0.0
  %1479 = vmatpush1.msra.mxu0 0.0
  %1480 = vmatprep.subr.mxu0 0.0
  %1481 = vmatpush1.msra.mxu0 0.0
  %1482 = vmatprep.subr.mxu0 0.0
  %1483 = vmatpush1.msra.mxu0 0.0
  %1484 = vmatprep.subr.mxu0 0.0
  %1485 = vmatpush1.msra.mxu0 0.0
  %1486 = vmatprep.subr.mxu0 0.0
  %1487 = vmatpush1.msra.mxu0 0.0
  %1488 = vmatprep.subr.mxu0 0.0
  %1489 = vmatpush1.msra.mxu0 0.0
  %1490 = vmatprep.subr.mxu0 0.0
  %1491 = vmatpush1.msra.mxu0 0.0
  %1492 = vmatprep.subr.mxu0 0.0
  %1493 = vmatpush1.msra.mxu0 0.0
  %1494 = vmatprep.subr.mxu0 0.0
  %1495 = vmatpush1.msra.mxu0 %v498
  %1496 = vmatprep.subr.mxu0 0.0
  %1497 = vmatpush1.msra.mxu0 %v497
  %1498 = vmatprep.subr.mxu0 0.0
  %1499 = vmatpush1.msra.mxu0 %v496
  %1500 = vmatprep.subr.mxu0 0.0
  %1501 = vmatpush1.msra.mxu0 %v495
  %1502 = vmatprep.subr.mxu0 0.0
  %1503 = vmatpush1.msra.mxu0 %v494
  %1504 = vmatprep.subr.mxu0 0.0
  %1505 = vmatpush1.msra.mxu0 %v493
  %1506 = vmatprep.subr.mxu0 0.0
  %1507 = vmatpush1.msra.mxu0 %v492
  %1508 = vmatprep.subr.mxu0 0.0
  %1509 = vmatpush1.msra.mxu0 %v491
  %1510 = vmatprep.subr.mxu0 0.0
  %1511 = vmatpush2.msra.mxu0 0.0
  %1512 = vmatprep.subr.mxu0 0.0
  %1513 = vmatpush2.msra.mxu0 0.0
  %1514 = vmatprep.subr.mxu0 0.0
  %1515 = vmatpush2.msra.mxu0 0.0
  %1516 = vmatprep.subr.mxu0 0.0
  %1517 = vmatpush2.msra.mxu0 0.0
  %1518 = vmatprep.subr.mxu0 0.0
  %1519 = vmatpush2.msra.mxu0 0.0
  %1520 = vmatprep.subr.mxu0 0.0
  %1521 = vmatpush2.msra.mxu0 0.0
  %1522 = vmatprep.subr.mxu0 0.0
  %1523 = vmatpush2.msra.mxu0 0.0
  %1524 = vmatprep.subr.mxu0 0.0
  %1525 = vmatpush2.msra.mxu0 0.0
  %1526 = vmatprep.subr.mxu0 0.0
  %1527 = vmatpush2.msra.mxu0 0.0
  %1528 = vmatprep.subr.mxu0 0.0
  %1529 = vmatpush2.msra.mxu0 0.0
  %1530 = vmatprep.subr.mxu0 0.0
  %1531 = vmatpush2.msra.mxu0 0.0
  %1532 = vmatprep.subr.mxu0 0.0
  %1533 = vmatpush2.msra.mxu0 0.0
  %1534 = vmatprep.subr.mxu0 0.0
  %1535 = vmatpush2.msra.mxu0 0.0
  %1536 = vmatprep.subr.mxu0 0.0
  %1537 = vmatpush2.msra.mxu0 0.0
  %1538 = vmatprep.subr.mxu0 0.0
  %1539 = vmatpush2.msra.mxu0 0.0
  %1540 = vmatprep.subr.mxu0 0.0
  %1541 = vmatpush2.msra.mxu0 0.0
  %1542 = vmatprep.mubr.f32.mxu0 0.0
  %1543 = vmatmul.mubr.f32.gmra.mxu0 %v1476
  %v1544 = vpop.f32.mrf.mxu0
  %v1545 = vadd.f32 0.0, %v1544
  %v1546 = vpop.f32.mrf.mxu0
  %1547 = vdwg.mxu0
  %v1548 = vadd.f32 %v1474, %v1545
  %v1549 = vrot.slane %v163, 4
  %v1550 = vsel %vm166, %v1549, 0
  %1552 = vmatprep.subr.mxu0 0.0
  %1553 = vmatpush1.msra.mxu0 0.0
  %1554 = vmatprep.subr.mxu0 0.0
  %1555 = vmatpush1.msra.mxu0 0.0
  %1556 = vmatprep.subr.mxu0 0.0
  %1557 = vmatpush1.msra.mxu0 0.0
  %1558 = vmatprep.subr.mxu0 0.0
  %1559 = vmatpush1.msra.mxu0 0.0
  %1560 = vmatprep.subr.mxu0 0.0
  %1561 = vmatpush1.msra.mxu0 0.0
  %1562 = vmatprep.subr.mxu0 0.0
  %1563 = vmatpush1.msra.mxu0 0.0
  %1564 = vmatprep.subr.mxu0 0.0
  %1565 = vmatpush1.msra.mxu0 0.0
  %1566 = vmatprep.subr.mxu0 0.0
  %1567 = vmatpush1.msra.mxu0 0.0
  %1568 = vmatprep.subr.mxu0 0.0
  %1569 = vmatpush1.msra.mxu0 %v506
  %1570 = vmatprep.subr.mxu0 0.0
  %1571 = vmatpush1.msra.mxu0 %v505
  %1572 = vmatprep.subr.mxu0 0.0
  %1573 = vmatpush1.msra.mxu0 %v504
  %1574 = vmatprep.subr.mxu0 0.0
  %1575 = vmatpush1.msra.mxu0 %v503
  %1576 = vmatprep.subr.mxu0 0.0
  %1577 = vmatpush1.msra.mxu0 %v502
  %1578 = vmatprep.subr.mxu0 0.0
  %1579 = vmatpush1.msra.mxu0 %v501
  %1580 = vmatprep.subr.mxu0 0.0
  %1581 = vmatpush1.msra.mxu0 %v500
  %1582 = vmatprep.subr.mxu0 0.0
  %1583 = vmatpush1.msra.mxu0 %v499
  %1584 = vmatprep.subr.mxu0 0.0
  %1585 = vmatpush2.msra.mxu0 0.0
  %1586 = vmatprep.subr.mxu0 0.0
  %1587 = vmatpush2.msra.mxu0 0.0
  %1588 = vmatprep.subr.mxu0 0.0
  %1589 = vmatpush2.msra.mxu0 0.0
  %1590 = vmatprep.subr.mxu0 0.0
  %1591 = vmatpush2.msra.mxu0 0.0
  %1592 = vmatprep.subr.mxu0 0.0
  %1593 = vmatpush2.msra.mxu0 0.0
  %1594 = vmatprep.subr.mxu0 0.0
  %1595 = vmatpush2.msra.mxu0 0.0
  %1596 = vmatprep.subr.mxu0 0.0
  %1597 = vmatpush2.msra.mxu0 0.0
  %1598 = vmatprep.subr.mxu0 0.0
  %1599 = vmatpush2.msra.mxu0 0.0
  %1600 = vmatprep.subr.mxu0 0.0
  %1601 = vmatpush2.msra.mxu0 0.0
  %1602 = vmatprep.subr.mxu0 0.0
  %1603 = vmatpush2.msra.mxu0 0.0
  %1604 = vmatprep.subr.mxu0 0.0
  %1605 = vmatpush2.msra.mxu0 0.0
  %1606 = vmatprep.subr.mxu0 0.0
  %1607 = vmatpush2.msra.mxu0 0.0
  %1608 = vmatprep.subr.mxu0 0.0
  %1609 = vmatpush2.msra.mxu0 0.0
  %1610 = vmatprep.subr.mxu0 0.0
  %1611 = vmatpush2.msra.mxu0 0.0
  %1612 = vmatprep.subr.mxu0 0.0
  %1613 = vmatpush2.msra.mxu0 0.0
  %1614 = vmatprep.subr.mxu0 0.0
  %1615 = vmatpush2.msra.mxu0 0.0
  %1616 = vmatprep.mubr.f32.mxu0 0.0
  %1617 = vmatmul.mubr.f32.gmra.mxu0 %v1550
  %v1618 = vpop.f32.mrf.mxu0
  %v1619 = vadd.f32 0.0, %v1618
  %v1620 = vpop.f32.mrf.mxu0
  %1621 = vdwg.mxu0
  %v1622 = vadd.f32 %v1548, %v1619
  %v1623 = vrot.slane %v163, 6
  %v1624 = vsel %vm166, %v1623, 0
  %1626 = vmatprep.subr.mxu0 0.0
  %1627 = vmatpush1.msra.mxu0 0.0
  %1628 = vmatprep.subr.mxu0 0.0
  %1629 = vmatpush1.msra.mxu0 0.0
  %1630 = vmatprep.subr.mxu0 0.0
  %1631 = vmatpush1.msra.mxu0 0.0
  %1632 = vmatprep.subr.mxu0 0.0
  %1633 = vmatpush1.msra.mxu0 0.0
  %1634 = vmatprep.subr.mxu0 0.0
  %1635 = vmatpush1.msra.mxu0 0.0
  %1636 = vmatprep.subr.mxu0 0.0
  %1637 = vmatpush1.msra.mxu0 0.0
  %1638 = vmatprep.subr.mxu0 0.0
  %1639 = vmatpush1.msra.mxu0 0.0
  %1640 = vmatprep.subr.mxu0 0.0
  %1641 = vmatpush1.msra.mxu0 0.0
  %1642 = vmatprep.subr.mxu0 0.0
  %1643 = vmatpush1.msra.mxu0 %v514
  %1644 = vmatprep.subr.mxu0 0.0
  %1645 = vmatpush1.msra.mxu0 %v513
  %1646 = vmatprep.subr.mxu0 0.0
  %1647 = vmatpush1.msra.mxu0 %v512
  %1648 = vmatprep.subr.mxu0 0.0
  %1649 = vmatpush1.msra.mxu0 %v511
  %1650 = vmatprep.subr.mxu0 0.0
  %1651 = vmatpush1.msra.mxu0 %v510
  %1652 = vmatprep.subr.mxu0 0.0
  %1653 = vmatpush1.msra.mxu0 %v509
  %1654 = vmatprep.subr.mxu0 0.0
  %1655 = vmatpush1.msra.mxu0 %v508
  %1656 = vmatprep.subr.mxu0 0.0
  %1657 = vmatpush1.msra.mxu0 %v507
  %1658 = vmatprep.subr.mxu0 0.0
  %1659 = vmatpush2.msra.mxu0 0.0
  %1660 = vmatprep.subr.mxu0 0.0
  %1661 = vmatpush2.msra.mxu0 0.0
  %1662 = vmatprep.subr.mxu0 0.0
  %1663 = vmatpush2.msra.mxu0 0.0
  %1664 = vmatprep.subr.mxu0 0.0
  %1665 = vmatpush2.msra.mxu0 0.0
  %1666 = vmatprep.subr.mxu0 0.0
  %1667 = vmatpush2.msra.mxu0 0.0
  %1668 = vmatprep.subr.mxu0 0.0
  %1669 = vmatpush2.msra.mxu0 0.0
  %1670 = vmatprep.subr.mxu0 0.0
  %1671 = vmatpush2.msra.mxu0 0.0
  %1672 = vmatprep.subr.mxu0 0.0
  %1673 = vmatpush2.msra.mxu0 0.0
  %1674 = vmatprep.subr.mxu0 0.0
  %1675 = vmatpush2.msra.mxu0 0.0
  %1676 = vmatprep.subr.mxu0 0.0
  %1677 = vmatpush2.msra.mxu0 0.0
  %1678 = vmatprep.subr.mxu0 0.0
  %1679 = vmatpush2.msra.mxu0 0.0
  %1680 = vmatprep.subr.mxu0 0.0
  %1681 = vmatpush2.msra.mxu0 0.0
  %1682 = vmatprep.subr.mxu0 0.0
  %1683 = vmatpush2.msra.mxu0 0.0
  %1684 = vmatprep.subr.mxu0 0.0
  %1685 = vmatpush2.msra.mxu0 0.0
  %1686 = vmatprep.subr.mxu0 0.0
  %1687 = vmatpush2.msra.mxu0 0.0
  %1688 = vmatprep.subr.mxu0 0.0
  %1689 = vmatpush2.msra.mxu0 0.0
  %1690 = vmatprep.mubr.f32.mxu0 0.0
  %1691 = vmatmul.mubr.f32.gmra.mxu0 %v1624
  %v1692 = vpop.f32.mrf.mxu0
  %v1693 = vadd.f32 0.0, %v1692
  %v1694 = vpop.f32.mrf.mxu0
  %1695 = vdwg.mxu0
  %v1696 = vadd.f32 %v1622, %v1693
  %v1697 = vld [vmem:[%s8] sm:$0x1]
  %v1699 = vlaneseq
  %v1700 = vshrl.u32 %v1699, 7
  %v1701 = vsub.s32 0, %v1700
  %v1702 = vrot.slane %v1697, %v1701
  %v1704 = vadd.f32 %v1696, %v1702
  %vm1705 = vcmp.ge.f32.partialorder %v1704, 0.0
  %v1706 = vmul.f32 %v1704, 0.01
  %v1707 = vsel %vm1705, %v1704, %v1706
  %v1708 = vld [vmem:[%s11] sm:$0xff]
  %v1709 = vld [vmem:[%s11 + $0x8] sm:$0xff]
  %v1710 = vld [vmem:[%s11 + $0x10] sm:$0xff]
  %v1711 = vld [vmem:[%s11 + $0x18] sm:$0xff]
  %v1712 = vld [vmem:[%s12] sm:$0xff]
  %v1713 = vld [vmem:[%s12 + $0x8] sm:$0xff]
  %v1714 = vld [vmem:[%s12 + $0x10] sm:$0xff]
  %v1715 = vld [vmem:[%s12 + $0x18] sm:$0xff]
  %vm1716 = vcmask 261120
  %v1718 = vsel %vm1716, %v1707, 0
  %1720 = vmatprep.subr.mxu0 0.0
  %1721 = vmatpush1.msra.mxu0 0.0
  %1722 = vmatprep.subr.mxu0 0.0
  %1723 = vmatpush1.msra.mxu0 0.0
  %1724 = vmatprep.subr.mxu0 0.0
  %1725 = vmatpush1.msra.mxu0 0.0
  %1726 = vmatprep.subr.mxu0 0.0
  %1727 = vmatpush1.msra.mxu0 0.0
  %1728 = vmatprep.subr.mxu0 0.0
  %1729 = vmatpush1.msra.mxu0 0.0
  %1730 = vmatprep.subr.mxu0 0.0
  %1731 = vmatpush1.msra.mxu0 0.0
  %1732 = vmatprep.subr.mxu0 0.0
  %1733 = vmatpush1.msra.mxu0 0.0
  %1734 = vmatprep.subr.mxu0 0.0
  %1735 = vmatpush1.msra.mxu0 0.0
  %1736 = vmatprep.subr.mxu0 0.0
  %1737 = vmatpush1.msra.mxu0 0.0
  %1738 = vmatprep.subr.mxu0 0.0
  %1739 = vmatpush1.msra.mxu0 0.0
  %1740 = vmatprep.subr.mxu0 0.0
  %1741 = vmatpush1.msra.mxu0 0.0
  %1742 = vmatprep.subr.mxu0 0.0
  %1743 = vmatpush1.msra.mxu0 0.0
  %1744 = vmatprep.subr.mxu0 0.0
  %1745 = vmatpush1.msra.mxu0 %v1715
  %1746 = vmatprep.subr.mxu0 0.0
  %1747 = vmatpush1.msra.mxu0 %v1714
  %1748 = vmatprep.subr.mxu0 0.0
  %1749 = vmatpush1.msra.mxu0 %v1713
  %1750 = vmatprep.subr.mxu0 0.0
  %1751 = vmatpush1.msra.mxu0 %v1712
  %1752 = vmatprep.subr.mxu0 0.0
  %1753 = vmatpush2.msra.mxu0 0.0
  %1754 = vmatprep.subr.mxu0 0.0
  %1755 = vmatpush2.msra.mxu0 0.0
  %1756 = vmatprep.subr.mxu0 0.0
  %1757 = vmatpush2.msra.mxu0 0.0
  %1758 = vmatprep.subr.mxu0 0.0
  %1759 = vmatpush2.msra.mxu0 0.0
  %1760 = vmatprep.subr.mxu0 0.0
  %1761 = vmatpush2.msra.mxu0 0.0
  %1762 = vmatprep.subr.mxu0 0.0
  %1763 = vmatpush2.msra.mxu0 0.0
  %1764 = vmatprep.subr.mxu0 0.0
  %1765 = vmatpush2.msra.mxu0 0.0
  %1766 = vmatprep.subr.mxu0 0.0
  %1767 = vmatpush2.msra.mxu0 0.0
  %1768 = vmatprep.subr.mxu0 0.0
  %1769 = vmatpush2.msra.mxu0 0.0
  %1770 = vmatprep.subr.mxu0 0.0
  %1771 = vmatpush2.msra.mxu0 0.0
  %1772 = vmatprep.subr.mxu0 0.0
  %1773 = vmatpush2.msra.mxu0 0.0
  %1774 = vmatprep.subr.mxu0 0.0
  %1775 = vmatpush2.msra.mxu0 0.0
  %1776 = vmatprep.subr.mxu0 0.0
  %1777 = vmatpush2.msra.mxu0 0.0
  %1778 = vmatprep.subr.mxu0 0.0
  %1779 = vmatpush2.msra.mxu0 0.0
  %1780 = vmatprep.subr.mxu0 0.0
  %1781 = vmatpush2.msra.mxu0 0.0
  %1782 = vmatprep.subr.mxu0 0.0
  %1783 = vmatpush2.msra.mxu0 0.0
  %1784 = vmatprep.mubr.f32.mxu0 0.0
  %1785 = vmatmul.mubr.f32.gmra.mxu0 %v1718
  %v1786 = vpop.f32.mrf.mxu0
  %v1787 = vadd.f32 0.0, %v1786
  %v1788 = vpop.f32.mrf.mxu0
  %1789 = vdwg.mxu0
  %v1791 = vsel %vm1716, %v294, 0
  %1793 = vmatprep.subr.mxu0 0.0
  %1794 = vmatpush1.msra.mxu0 0.0
  %1795 = vmatprep.subr.mxu0 0.0
  %1796 = vmatpush1.msra.mxu0 0.0
  %1797 = vmatprep.subr.mxu0 0.0
  %1798 = vmatpush1.msra.mxu0 0.0
  %1799 = vmatprep.subr.mxu0 0.0
  %1800 = vmatpush1.msra.mxu0 0.0
  %1801 = vmatprep.subr.mxu0 0.0
  %1802 = vmatpush1.msra.mxu0 0.0
  %1803 = vmatprep.subr.mxu0 0.0
  %1804 = vmatpush1.msra.mxu0 0.0
  %1805 = vmatprep.subr.mxu0 0.0
  %1806 = vmatpush1.msra.mxu0 0.0
  %1807 = vmatprep.subr.mxu0 0.0
  %1808 = vmatpush1.msra.mxu0 0.0
  %1809 = vmatprep.subr.mxu0 0.0
  %1810 = vmatpush1.msra.mxu0 0.0
  %1811 = vmatprep.subr.mxu0 0.0
  %1812 = vmatpush1.msra.mxu0 0.0
  %1813 = vmatprep.subr.mxu0 0.0
  %1814 = vmatpush1.msra.mxu0 0.0
  %1815 = vmatprep.subr.mxu0 0.0
  %1816 = vmatpush1.msra.mxu0 0.0
  %1817 = vmatprep.subr.mxu0 0.0
  %1818 = vmatpush1.msra.mxu0 %v1711
  %1819 = vmatprep.subr.mxu0 0.0
  %1820 = vmatpush1.msra.mxu0 %v1710
  %1821 = vmatprep.subr.mxu0 0.0
  %1822 = vmatpush1.msra.mxu0 %v1709
  %1823 = vmatprep.subr.mxu0 0.0
  %1824 = vmatpush1.msra.mxu0 %v1708
  %1825 = vmatprep.subr.mxu0 0.0
  %1826 = vmatpush2.msra.mxu0 0.0
  %1827 = vmatprep.subr.mxu0 0.0
  %1828 = vmatpush2.msra.mxu0 0.0
  %1829 = vmatprep.subr.mxu0 0.0
  %1830 = vmatpush2.msra.mxu0 0.0
  %1831 = vmatprep.subr.mxu0 0.0
  %1832 = vmatpush2.msra.mxu0 0.0
  %1833 = vmatprep.subr.mxu0 0.0
  %1834 = vmatpush2.msra.mxu0 0.0
  %1835 = vmatprep.subr.mxu0 0.0
  %1836 = vmatpush2.msra.mxu0 0.0
  %1837 = vmatprep.subr.mxu0 0.0
  %1838 = vmatpush2.msra.mxu0 0.0
  %1839 = vmatprep.subr.mxu0 0.0
  %1840 = vmatpush2.msra.mxu0 0.0
  %1841 = vmatprep.subr.mxu0 0.0
  %1842 = vmatpush2.msra.mxu0 0.0
  %1843 = vmatprep.subr.mxu0 0.0
  %1844 = vmatpush2.msra.mxu0 0.0
  %1845 = vmatprep.subr.mxu0 0.0
  %1846 = vmatpush2.msra.mxu0 0.0
  %1847 = vmatprep.subr.mxu0 0.0
  %1848 = vmatpush2.msra.mxu0 0.0
  %1849 = vmatprep.subr.mxu0 0.0
  %1850 = vmatpush2.msra.mxu0 0.0
  %1851 = vmatprep.subr.mxu0 0.0
  %1852 = vmatpush2.msra.mxu0 0.0
  %1853 = vmatprep.subr.mxu0 0.0
  %1854 = vmatpush2.msra.mxu0 0.0
  %1855 = vmatprep.subr.mxu0 0.0
  %1856 = vmatpush2.msra.mxu0 0.0
  %1857 = vmatprep.mubr.f32.mxu0 0.0
  %1858 = vmatmul.mubr.f32.gmra.mxu0 %v1791
  %v1859 = vpop.f32.mrf.mxu0
  %v1860 = vadd.f32 %v1787, %v1859
  %v1861 = vpop.f32.mrf.mxu0
  %1862 = vdwg.mxu0
  %v1863 = vld [vmem:[%s13] sm:$0xff]
  %v1864 = vld [vmem:[%s13 + $0x8] sm:$0xff]
  %v1865 = vld [vmem:[%s13 + $0x10] sm:$0xff]
  %v1866 = vld [vmem:[%s13 + $0x18] sm:$0xff]
  %v1868 = vsel %vm1716, %v386, 0
  %1870 = vmatprep.subr.mxu0 0.0
  %1871 = vmatpush1.msra.mxu0 0.0
  %1872 = vmatprep.subr.mxu0 0.0
  %1873 = vmatpush1.msra.mxu0 0.0
  %1874 = vmatprep.subr.mxu0 0.0
  %1875 = vmatpush1.msra.mxu0 0.0
  %1876 = vmatprep.subr.mxu0 0.0
  %1877 = vmatpush1.msra.mxu0 0.0
  %1878 = vmatprep.subr.mxu0 0.0
  %1879 = vmatpush1.msra.mxu0 0.0
  %1880 = vmatprep.subr.mxu0 0.0
  %1881 = vmatpush1.msra.mxu0 0.0
  %1882 = vmatprep.subr.mxu0 0.0
  %1883 = vmatpush1.msra.mxu0 0.0
  %1884 = vmatprep.subr.mxu0 0.0
  %1885 = vmatpush1.msra.mxu0 0.0
  %1886 = vmatprep.subr.mxu0 0.0
  %1887 = vmatpush1.msra.mxu0 0.0
  %1888 = vmatprep.subr.mxu0 0.0
  %1889 = vmatpush1.msra.mxu0 0.0
  %1890 = vmatprep.subr.mxu0 0.0
  %1891 = vmatpush1.msra.mxu0 0.0
  %1892 = vmatprep.subr.mxu0 0.0
  %1893 = vmatpush1.msra.mxu0 0.0
  %1894 = vmatprep.subr.mxu0 0.0
  %1895 = vmatpush1.msra.mxu0 %v1866
  %1896 = vmatprep.subr.mxu0 0.0
  %1897 = vmatpush1.msra.mxu0 %v1865
  %1898 = vmatprep.subr.mxu0 0.0
  %1899 = vmatpush1.msra.mxu0 %v1864
  %1900 = vmatprep.subr.mxu0 0.0
  %1901 = vmatpush1.msra.mxu0 %v1863
  %1902 = vmatprep.subr.mxu0 0.0
  %1903 = vmatpush2.msra.mxu0 0.0
  %1904 = vmatprep.subr.mxu0 0.0
  %1905 = vmatpush2.msra.mxu0 0.0
  %1906 = vmatprep.subr.mxu0 0.0
  %1907 = vmatpush2.msra.mxu0 0.0
  %1908 = vmatprep.subr.mxu0 0.0
  %1909 = vmatpush2.msra.mxu0 0.0
  %1910 = vmatprep.subr.mxu0 0.0
  %1911 = vmatpush2.msra.mxu0 0.0
  %1912 = vmatprep.subr.mxu0 0.0
  %1913 = vmatpush2.msra.mxu0 0.0
  %1914 = vmatprep.subr.mxu0 0.0
  %1915 = vmatpush2.msra.mxu0 0.0
  %1916 = vmatprep.subr.mxu0 0.0
  %1917 = vmatpush2.msra.mxu0 0.0
  %1918 = vmatprep.subr.mxu0 0.0
  %1919 = vmatpush2.msra.mxu0 0.0
  %1920 = vmatprep.subr.mxu0 0.0
  %1921 = vmatpush2.msra.mxu0 0.0
  %1922 = vmatprep.subr.mxu0 0.0
  %1923 = vmatpush2.msra.mxu0 0.0
  %1924 = vmatprep.subr.mxu0 0.0
  %1925 = vmatpush2.msra.mxu0 0.0
  %1926 = vmatprep.subr.mxu0 0.0
  %1927 = vmatpush2.msra.mxu0 0.0
  %1928 = vmatprep.subr.mxu0 0.0
  %1929 = vmatpush2.msra.mxu0 0.0
  %1930 = vmatprep.subr.mxu0 0.0
  %1931 = vmatpush2.msra.mxu0 0.0
  %1932 = vmatprep.subr.mxu0 0.0
  %1933 = vmatpush2.msra.mxu0 0.0
  %1934 = vmatprep.mubr.f32.mxu0 0.0
  %1935 = vmatmul.mubr.f32.gmra.mxu0 %v1868
  %v1936 = vpop.f32.mrf.mxu0
  %v1937 = vadd.f32 0.0, %v1936
  %v1938 = vpop.f32.mrf.mxu0
  %1939 = vdwg.mxu0
  %v1940 = vadd.f32 %v1860, %v1937
  %v1941 = vld [vmem:[#allocation2] sm:$0x1]
  %v1943 = vlaneseq
  %v1944 = vshrl.u32 %v1943, 7
  %v1945 = vsub.s32 0, %v1944
  %v1946 = vrot.slane %v1941, %v1945
  %v1948 = vadd.f32 %v1940, %v1946
  %v1949 = vxor.u32 %v1948, 2147483648
  %v1950 = vmul.f32 %v1949, 1.442695
  %v1951 = vpow.pop %v1950
  %v1952 = vadd.f32 %v1951, 1.0
  %v1953 = vrcp.pop %v1952
  %v1954 = vmul.f32 1.0, %v1953
  %vm1955 = vcmask 1024
  %1956 = vst.msk [vmem:[%s16] sm:$0x3] %vm1955, %v1954
  // Predicated region
  $region62: #{forward.1} parent=0 // pred_check
    _
  $region63: #{forward.1} parent=0 // pred_check_branch
    %1958 = sbr.rel (0) target = $region65
  $region64: #{forward.1} parent=0 // pred_region
    _
  $region65: #{forward.1} parent=0 // pred_fallthru
    _
  // Predicated region
  $region66: #{forward.1} parent=0 // pred_check
    _
  $region67: #{forward.1} parent=0 // pred_check_branch
    %1960 = sbr.rel (0) target = $region69
  $region68: #{forward.1} parent=0 // pred_region
    _
  $region69: #{forward.1} parent=0 // pred_fallthru
    _
  // Predicated region
  $region70: #{forward.1} parent=0 // pred_check
    _
  $region71: #{forward.1} parent=0 // pred_check_branch
    %1962 = sbr.rel (0) target = $region73
  $region72: #{forward.1} parent=0 // pred_region
    _
  $region73: #{forward.1} parent=0 // pred_fallthru
    _
  // Predicated region
  $region74: #{forward.1} parent=0 // pred_check
    _
  $region75: #{forward.1} parent=0 // pred_check_branch
    %1964 = sbr.rel (0) target = $region77
  $region76: #{forward.1} parent=0 // pred_region
    _
  $region77: #{forward.1} parent=0 // pred_fallthru
    _

</llo_original>
